<compile_context>
chip_gen: v7x
topology: tpu7x:2x2x1
jax: 0.10.0
libtpu: 0.0.40
codegen_flags: <defaults>
</compile_context>

<pallas_src>
import jax
import jax.numpy as jnp
from jax import lax
from jax.experimental import pallas as pl
from jax.experimental.pallas import tpu as pltpu


def _dgcnn_kernel(adjb_ref, x_ref, w1_ref, bh_ref, wf_ref, fcb_ref, o_ref, h_ref):
    """Fused forward: adj relu -> Laplacian apply -> Chebyshev(k=2) graph conv
    -> B1ReLU -> FC head.

    Block shapes (full arrays; grid tiles only the batch dim):
      adjb_ref: (E, E)      adj + adj_bias (scalar bias pre-folded)
      x_ref:    (bt, E, C)  one batch tile
      w1_ref:   (C, H)      Chebyshev weight rows for the (lap @ x) term
      bh_ref:   (1, H)      b1 + sum over C of the T0 (== ones) weight rows
      wf_ref:   (E, H, M)   fc weight, pre-reshaped (no in-kernel flatten)
      fcb_ref:  (1, M)
      o_ref:    (bt, M)
      h_ref:    VMEM scratch (bt, E, H)
    """
    # adj = relu(adj + adj_bias); dr = (row_sum(adj) + 1e-5)^{-1/2}  (once per tile)
    a = jnp.maximum(adjb_ref[...], 0.0)                          # (E, E)
    dr = lax.rsqrt(jnp.sum(a, axis=1, keepdims=True) + 1e-5)     # (E, 1), EUP

    w1 = w1_ref[...]                                             # (C, H)
    bh = bh_ref[...]                                             # (1, H)

    bt = x_ref.shape[0]
    for b in range(bt):                                          # static unroll
        xb = x_ref[b]                                            # (E, C)
        # lap @ x without materializing lap:  x - dr * (A @ (dr * x))
        lx = xb - dr * jnp.dot(a, dr * xb,
                               preferred_element_type=jnp.float32)    # (E, C)
        hb = jnp.dot(lx, w1, preferred_element_type=jnp.float32)      # (E, H)
        # dropout == identity (eval); B1ReLU == relu(bias + x)
        h_ref[b] = jnp.maximum(hb + bh, 0.0)

    # FC head fused in-register: out[b, m] = sum_{e,h} h[b,e,h] * wf[e,h,m] + fc_b[m]
    E = h_ref.shape[1]
    M = wf_ref.shape[2]
    acc = jnp.zeros((bt, M), jnp.float32)
    for e in range(E):                                           # static unroll
        acc = acc + jnp.dot(h_ref[:, e, :], wf_ref[e],
                            preferred_element_type=jnp.float32)  # (bt, M)
    o_ref[...] = acc + fcb_ref[...]


@jax.jit
def dgcnn_forward(x, adj, adj_bias, gc_w, b1, fc_w, fc_b):
    """Forward pass of DGCNN (single graph-conv layer, k=2, eval mode)."""
    B, E, C = x.shape
    H = gc_w.shape[1]
    M = fc_w.shape[0]
    bt = min(B, 8)                 # fuse small batches into one grid step;
    nb = pl.cdiv(B, bt)            # larger B keeps a parallel batch-tile axis

    # Parameter-only glue (trace-time): fold scalar bias, T0 term, fc layout.
    adjb = (adj + adj_bias).astype(jnp.float32)                               # (E, E)
    w1 = gc_w[1::2].astype(jnp.float32)                                       # (C, H)
    bias_h = (b1 + jnp.sum(gc_w[0::2], axis=0)).reshape(1, H).astype(jnp.float32)
    wf = fc_w.reshape(M, E, H).transpose(1, 2, 0).astype(jnp.float32)         # (E, H, M)
    fcb = fc_b.reshape(1, M).astype(jnp.float32)

    return pl.pallas_call(
        _dgcnn_kernel,
        out_shape=jax.ShapeDtypeStruct((B, M), jnp.float32),
        grid_spec=pltpu.PrefetchScalarGridSpec(
            num_scalar_prefetch=0,
            grid=(nb,),
            in_specs=[
                pl.BlockSpec((E, E), lambda i: (0, 0)),
                pl.BlockSpec((bt, E, C), lambda i: (i, 0, 0)),
                pl.BlockSpec((C, H), lambda i: (0, 0)),
                pl.BlockSpec((1, H), lambda i: (0, 0)),
                pl.BlockSpec((E, H, M), lambda i: (0, 0, 0)),
                pl.BlockSpec((1, M), lambda i: (0, 0)),
            ],
            out_specs=pl.BlockSpec((bt, M), lambda i: (i, 0)),
            scratch_shapes=[pltpu.VMEM((bt, E, H), jnp.float32)],
        ),
        compiler_params=pltpu.CompilerParams(
            dimension_semantics=("parallel",)),
    )(adjb, x, w1, bias_h, wf, fcb)


def _reference(x, adj, adj_bias, gc_w, b1, fc_w, fc_b):
    """Pure-JAX mirror of the PyTorch forward (eval mode)."""
    a = jnp.maximum(adj + adj_bias, 0.0)
    d = jnp.sum(a, axis=1)
    d_re = 1.0 / jnp.sqrt(d + 1e-5)
    lap = jnp.eye(a.shape[0], dtype=a.dtype) - (d_re[:, None] * a) * d_re[None, :]
    B, E, C = x.shape
    t0 = jnp.ones((B, E, C), x.dtype)
    lx = jnp.einsum("ij,bjc->bic", lap, x)
    cp = jnp.stack([t0, lx], axis=1)                     # (B, k, E, C)
    cp = jnp.transpose(cp, (0, 2, 3, 1)).reshape(B, E, -1)
    h = cp @ gc_w
    h = jnp.maximum(h + b1[None, None, :], 0.0)
    xf = h.reshape(B, -1)
    return xf @ fc_w.T + fc_b


if __name__ == "__main__":
    # Small shapes consistent with the module: batch=2, num_electrodes=16,
    # in_channels=8, layers=[32], num_embed=4, k=2.
    B, E, C, H, M, K = 2, 16, 8, 32, 4, 2

    key = jax.random.PRNGKey(0)
    k_adj, k_ab, k_gw, k_fc, k_x = jax.random.split(key, 5)

    # deterministic parameter init (shapes follow DGCNN.__init__)
    adj = (jax.random.uniform(k_adj, (E, E), jnp.float32, -1.0, 1.0)
           * jnp.sqrt(6.0 / (E + E)))                                  # xavier_uniform
    adj_bias = (jax.random.truncated_normal(k_ab, -2.0, 2.0, (1,), jnp.float32)
                * 0.1)                                                 # trunc_normal std=0.1
    gc_w = (jax.random.uniform(k_gw, (K * C, H), jnp.float32, -1.0, 1.0)
            * jnp.sqrt(6.0 / (K * C + H)))                             # xavier_uniform
    b1 = jnp.zeros((H,), jnp.float32)                                  # B1ReLU bias = 0
    fc_w = (jax.random.normal(k_fc, (M, E * H), jnp.float32)
            * jnp.sqrt(2.0 / (E * H + M)))                             # xavier_normal
    fc_b = jnp.zeros((M,), jnp.float32)                                # fc bias = 0

    x = jax.random.normal(k_x, (B, E, C), jnp.float32)

    out = dgcnn_forward(x, adj, adj_bias, gc_w, b1, fc_w, fc_b)
    out = jax.block_until_ready(out)

    ref = _reference(x, adj, adj_bias, gc_w, b1, fc_w, fc_b)
    assert out.shape == (B, M), out.shape
    assert jnp.allclose(out, ref, atol=1e-4, rtol=1e-4), (out, ref)
    print("KERNEL_OK")
</pallas_src>

<mosaic_0001>
module attributes {stable_mosaic.version = 11 : i64} {
  func.func @_dgcnn_kernel(%arg0: i32, %arg1: memref<16x16xf32, #tpu.memory_space<vmem>>, %arg2: memref<2x16x8xf32, #tpu.memory_space<vmem>>, %arg3: memref<8x32xf32, #tpu.memory_space<vmem>>, %arg4: memref<1x32xf32, #tpu.memory_space<vmem>>, %arg5: memref<16x32x4xf32, #tpu.memory_space<vmem>>, %arg6: memref<1x4xf32, #tpu.memory_space<vmem>>, %arg7: memref<2x4xf32, #tpu.memory_space<vmem>>, %arg8: memref<2x16x32xf32, #tpu.memory_space<vmem>>) attributes {dimension_semantics = [#tpu.dimension_semantics<parallel>], iteration_bounds = array<i64: 1>, scalar_prefetch = 0 : i64, scratch_operands = 1 : i64, tpu.core_type = #tpu.core_type<tc>, window_params = [{pipeline_mode = #tpu.pipeline_mode<synchronous>, transform_indices = @transform_0, window_bounds = array<i64: 16, 16>}, {transform_indices = @transform_1, window_bounds = array<i64: 2, 16, 8>}, {pipeline_mode = #tpu.pipeline_mode<synchronous>, transform_indices = @transform_2, window_bounds = array<i64: 8, 32>}, {pipeline_mode = #tpu.pipeline_mode<synchronous>, transform_indices = @transform_3, window_bounds = array<i64: 1, 32>}, {pipeline_mode = #tpu.pipeline_mode<synchronous>, transform_indices = @transform_4, window_bounds = array<i64: 16, 32, 4>}, {pipeline_mode = #tpu.pipeline_mode<synchronous>, transform_indices = @transform_5, window_bounds = array<i64: 1, 4>}, {transform_indices = @transform_6, window_bounds = array<i64: 2, 4>}]} {
    %c0 = arith.constant 0 : index
    %c0_0 = arith.constant 0 : index
    %0 = vector.load %arg1[%c0, %c0_0] : memref<16x16xf32, #tpu.memory_space<vmem>>, vector<16x16xf32>
    %cst = arith.constant 0.000000e+00 : f32
    %1 = vector.broadcast %cst : f32 to vector<16x16xf32>
    %2 = arith.maximumf %0, %1 : vector<16x16xf32>
    %cst_1 = arith.constant dense<0.000000e+00> : vector<16xf32>
    %3 = vector.multi_reduction <add>, %2, %cst_1 [1] : vector<16x16xf32> to vector<16xf32>
    %4 = vector.shape_cast %3 : vector<16xf32> to vector<16x1xf32>
    %cst_2 = arith.constant 9.99999974E-6 : f32
    %5 = vector.broadcast %cst_2 : f32 to vector<16x1xf32>
    %6 = arith.addf %4, %5 : vector<16x1xf32>
    %7 = math.rsqrt %6 : vector<16x1xf32>
    %c0_3 = arith.constant 0 : index
    %c0_4 = arith.constant 0 : index
    %8 = vector.load %arg3[%c0_3, %c0_4] : memref<8x32xf32, #tpu.memory_space<vmem>>, vector<8x32xf32>
    %c0_5 = arith.constant 0 : index
    %c0_6 = arith.constant 0 : index
    %9 = vector.load %arg4[%c0_5, %c0_6] : memref<1x32xf32, #tpu.memory_space<vmem>>, vector<1x32xf32>
    %c0_7 = arith.constant 0 : index
    %c0_8 = arith.constant 0 : index
    %c0_9 = arith.constant 0 : index
    %10 = vector.load %arg2[%c0_7, %c0_8, %c0_9] : memref<2x16x8xf32, #tpu.memory_space<vmem>>, vector<1x16x8xf32>
    %11 = vector.shape_cast %10 : vector<1x16x8xf32> to vector<16x8xf32>
    %12 = vector.broadcast %7 : vector<16x1xf32> to vector<16x8xf32>
    %13 = arith.mulf %12, %11 : vector<16x8xf32>
    %cst_10 = arith.constant dense<0.000000e+00> : vector<16x8xf32>
    %14 = tpu.matmul %2, %13, %cst_10 {dimension_numbers = #tpu.dot_dimension_numbers<[1], [0], [0], [1], [0, 0, 1, 1], [], []>} : vector<16x16xf32>, vector<16x8xf32>, vector<16x8xf32> -> vector<16x8xf32>
    %15 = vector.broadcast %7 : vector<16x1xf32> to vector<16x8xf32>
    %16 = arith.mulf %15, %14 : vector<16x8xf32>
    %17 = arith.subf %11, %16 : vector<16x8xf32>
    %cst_11 = arith.constant dense<0.000000e+00> : vector<16x32xf32>
    %18 = tpu.matmul %17, %8, %cst_11 {dimension_numbers = #tpu.dot_dimension_numbers<[1], [0], [0], [1], [0, 0, 1, 1], [], []>} : vector<16x8xf32>, vector<8x32xf32>, vector<16x32xf32> -> vector<16x32xf32>
    %19 = vector.broadcast %9 : vector<1x32xf32> to vector<16x32xf32>
    %20 = arith.addf %18, %19 : vector<16x32xf32>
    %cst_12 = arith.constant 0.000000e+00 : f32
    %21 = vector.broadcast %cst_12 : f32 to vector<16x32xf32>
    %22 = arith.maximumf %20, %21 : vector<16x32xf32>
    %c0_13 = arith.constant 0 : index
    %c0_14 = arith.constant 0 : index
    %c0_15 = arith.constant 0 : index
    %23 = vector.load %arg8[%c0_13, %c0_14, %c0_15] : memref<2x16x32xf32, #tpu.memory_space<vmem>>, vector<1x16x32xf32>
    %24 = vector.shape_cast %23 : vector<1x16x32xf32> to vector<16x32xf32>
    %25 = vector.shape_cast %22 : vector<16x32xf32> to vector<1x16x32xf32>
    tpu.vector_store %arg8[%c0_13, %c0_14, %c0_15], %25 {strides = array<i32>} : memref<2x16x32xf32, #tpu.memory_space<vmem>>, vector<1x16x32xf32>,
    %c1 = arith.constant 1 : index
    %c0_16 = arith.constant 0 : index
    %c0_17 = arith.constant 0 : index
    %26 = vector.load %arg2[%c1, %c0_16, %c0_17] : memref<2x16x8xf32, #tpu.memory_space<vmem>>, vector<1x16x8xf32>
    %27 = vector.shape_cast %26 : vector<1x16x8xf32> to vector<16x8xf32>
    %28 = vector.broadcast %7 : vector<16x1xf32> to vector<16x8xf32>
    %29 = arith.mulf %28, %27 : vector<16x8xf32>
    %cst_18 = arith.constant dense<0.000000e+00> : vector<16x8xf32>
    %30 = tpu.matmul %2, %29, %cst_18 {dimension_numbers = #tpu.dot_dimension_numbers<[1], [0], [0], [1], [0, 0, 1, 1], [], []>} : vector<16x16xf32>, vector<16x8xf32>, vector<16x8xf32> -> vector<16x8xf32>
    %31 = vector.broadcast %7 : vector<16x1xf32> to vector<16x8xf32>
    %32 = arith.mulf %31, %30 : vector<16x8xf32>
    %33 = arith.subf %27, %32 : vector<16x8xf32>
    %cst_19 = arith.constant dense<0.000000e+00> : vector<16x32xf32>
    %34 = tpu.matmul %33, %8, %cst_19 {dimension_numbers = #tpu.dot_dimension_numbers<[1], [0], [0], [1], [0, 0, 1, 1], [], []>} : vector<16x8xf32>, vector<8x32xf32>, vector<16x32xf32> -> vector<16x32xf32>
    %35 = vector.broadcast %9 : vector<1x32xf32> to vector<16x32xf32>
    %36 = arith.addf %34, %35 : vector<16x32xf32>
    %cst_20 = arith.constant 0.000000e+00 : f32
    %37 = vector.broadcast %cst_20 : f32 to vector<16x32xf32>
    %38 = arith.maximumf %36, %37 : vector<16x32xf32>
    %c1_21 = arith.constant 1 : index
    %c0_22 = arith.constant 0 : index
    %c0_23 = arith.constant 0 : index
    %39 = vector.load %arg8[%c1_21, %c0_22, %c0_23] : memref<2x16x32xf32, #tpu.memory_space<vmem>>, vector<1x16x32xf32>
    %40 = vector.shape_cast %39 : vector<1x16x32xf32> to vector<16x32xf32>
    %41 = vector.shape_cast %38 : vector<16x32xf32> to vector<1x16x32xf32>
    tpu.vector_store %arg8[%c1_21, %c0_22, %c0_23], %41 {strides = array<i32>} : memref<2x16x32xf32, #tpu.memory_space<vmem>>, vector<1x16x32xf32>,
    %cst_24 = arith.constant 0.000000e+00 : f32
    %42 = vector.broadcast %cst_24 : f32 to vector<2x4xf32>
    %c0_25 = arith.constant 0 : index
    %c0_26 = arith.constant 0 : index
    %c0_27 = arith.constant 0 : index
    %43 = vector.load %arg8[%c0_25, %c0_26, %c0_27] : memref<2x16x32xf32, #tpu.memory_space<vmem>>, vector<2x1x32xf32>
    %44 = vector.shape_cast %43 : vector<2x1x32xf32> to vector<2x32xf32>
    %c0_28 = arith.constant 0 : index
    %c0_29 = arith.constant 0 : index
    %c0_30 = arith.constant 0 : index
    %45 = vector.load %arg5[%c0_28, %c0_29, %c0_30] : memref<16x32x4xf32, #tpu.memory_space<vmem>>, vector<1x32x4xf32>
    %46 = vector.shape_cast %45 : vector<1x32x4xf32> to vector<32x4xf32>
    %cst_31 = arith.constant dense<0.000000e+00> : vector<2x4xf32>
    %47 = tpu.matmul %44, %46, %cst_31 {dimension_numbers = #tpu.dot_dimension_numbers<[1], [0], [0], [1], [0, 0, 1, 1], [], []>} : vector<2x32xf32>, vector<32x4xf32>, vector<2x4xf32> -> vector<2x4xf32>
    %48 = arith.addf %42, %47 : vector<2x4xf32>
    %c0_32 = arith.constant 0 : index
    %c1_33 = arith.constant 1 : index
    %c0_34 = arith.constant 0 : index
    %49 = vector.load %arg8[%c0_32, %c1_33, %c0_34] : memref<2x16x32xf32, #tpu.memory_space<vmem>>, vector<2x1x32xf32>
    %50 = vector.shape_cast %49 : vector<2x1x32xf32> to vector<2x32xf32>
    %c1_35 = arith.constant 1 : index
    %c0_36 = arith.constant 0 : index
    %c0_37 = arith.constant 0 : index
    %51 = vector.load %arg5[%c1_35, %c0_36, %c0_37] : memref<16x32x4xf32, #tpu.memory_space<vmem>>, vector<1x32x4xf32>
    %52 = vector.shape_cast %51 : vector<1x32x4xf32> to vector<32x4xf32>
    %cst_38 = arith.constant dense<0.000000e+00> : vector<2x4xf32>
    %53 = tpu.matmul %50, %52, %cst_38 {dimension_numbers = #tpu.dot_dimension_numbers<[1], [0], [0], [1], [0, 0, 1, 1], [], []>} : vector<2x32xf32>, vector<32x4xf32>, vector<2x4xf32> -> vector<2x4xf32>
    %54 = arith.addf %48, %53 : vector<2x4xf32>
    %c0_39 = arith.constant 0 : index
    %c2 = arith.constant 2 : index
    %c0_40 = arith.constant 0 : index
    %55 = vector.load %arg8[%c0_39, %c2, %c0_40] : memref<2x16x32xf32, #tpu.memory_space<vmem>>, vector<2x1x32xf32>
    %56 = vector.shape_cast %55 : vector<2x1x32xf32> to vector<2x32xf32>
    %c2_41 = arith.constant 2 : index
    %c0_42 = arith.constant 0 : index
    %c0_43 = arith.constant 0 : index
    %57 = vector.load %arg5[%c2_41, %c0_42, %c0_43] : memref<16x32x4xf32, #tpu.memory_space<vmem>>, vector<1x32x4xf32>
    %58 = vector.shape_cast %57 : vector<1x32x4xf32> to vector<32x4xf32>
    %cst_44 = arith.constant dense<0.000000e+00> : vector<2x4xf32>
    %59 = tpu.matmul %56, %58, %cst_44 {dimension_numbers = #tpu.dot_dimension_numbers<[1], [0], [0], [1], [0, 0, 1, 1], [], []>} : vector<2x32xf32>, vector<32x4xf32>, vector<2x4xf32> -> vector<2x4xf32>
    %60 = arith.addf %54, %59 : vector<2x4xf32>
    %c0_45 = arith.constant 0 : index
    %c3 = arith.constant 3 : index
    %c0_46 = arith.constant 0 : index
    %61 = vector.load %arg8[%c0_45, %c3, %c0_46] : memref<2x16x32xf32, #tpu.memory_space<vmem>>, vector<2x1x32xf32>
    %62 = vector.shape_cast %61 : vector<2x1x32xf32> to vector<2x32xf32>
    %c3_47 = arith.constant 3 : index
    %c0_48 = arith.constant 0 : index
    %c0_49 = arith.constant 0 : index
    %63 = vector.load %arg5[%c3_47, %c0_48, %c0_49] : memref<16x32x4xf32, #tpu.memory_space<vmem>>, vector<1x32x4xf32>
    %64 = vector.shape_cast %63 : vector<1x32x4xf32> to vector<32x4xf32>
    %cst_50 = arith.constant dense<0.000000e+00> : vector<2x4xf32>
    %65 = tpu.matmul %62, %64, %cst_50 {dimension_numbers = #tpu.dot_dimension_numbers<[1], [0], [0], [1], [0, 0, 1, 1], [], []>} : vector<2x32xf32>, vector<32x4xf32>, vector<2x4xf32> -> vector<2x4xf32>
    %66 = arith.addf %60, %65 : vector<2x4xf32>
    %c0_51 = arith.constant 0 : index
    %c4 = arith.constant 4 : index
    %c0_52 = arith.constant 0 : index
    %67 = vector.load %arg8[%c0_51, %c4, %c0_52] : memref<2x16x32xf32, #tpu.memory_space<vmem>>, vector<2x1x32xf32>
    %68 = vector.shape_cast %67 : vector<2x1x32xf32> to vector<2x32xf32>
    %c4_53 = arith.constant 4 : index
    %c0_54 = arith.constant 0 : index
    %c0_55 = arith.constant 0 : index
    %69 = vector.load %arg5[%c4_53, %c0_54, %c0_55] : memref<16x32x4xf32, #tpu.memory_space<vmem>>, vector<1x32x4xf32>
    %70 = vector.shape_cast %69 : vector<1x32x4xf32> to vector<32x4xf32>
    %cst_56 = arith.constant dense<0.000000e+00> : vector<2x4xf32>
    %71 = tpu.matmul %68, %70, %cst_56 {dimension_numbers = #tpu.dot_dimension_numbers<[1], [0], [0], [1], [0, 0, 1, 1], [], []>} : vector<2x32xf32>, vector<32x4xf32>, vector<2x4xf32> -> vector<2x4xf32>
    %72 = arith.addf %66, %71 : vector<2x4xf32>
    %c0_57 = arith.constant 0 : index
    %c5 = arith.constant 5 : index
    %c0_58 = arith.constant 0 : index
    %73 = vector.load %arg8[%c0_57, %c5, %c0_58] : memref<2x16x32xf32, #tpu.memory_space<vmem>>, vector<2x1x32xf32>
    %74 = vector.shape_cast %73 : vector<2x1x32xf32> to vector<2x32xf32>
    %c5_59 = arith.constant 5 : index
    %c0_60 = arith.constant 0 : index
    %c0_61 = arith.constant 0 : index
    %75 = vector.load %arg5[%c5_59, %c0_60, %c0_61] : memref<16x32x4xf32, #tpu.memory_space<vmem>>, vector<1x32x4xf32>
    %76 = vector.shape_cast %75 : vector<1x32x4xf32> to vector<32x4xf32>
    %cst_62 = arith.constant dense<0.000000e+00> : vector<2x4xf32>
    %77 = tpu.matmul %74, %76, %cst_62 {dimension_numbers = #tpu.dot_dimension_numbers<[1], [0], [0], [1], [0, 0, 1, 1], [], []>} : vector<2x32xf32>, vector<32x4xf32>, vector<2x4xf32> -> vector<2x4xf32>
    %78 = arith.addf %72, %77 : vector<2x4xf32>
    %c0_63 = arith.constant 0 : index
    %c6 = arith.constant 6 : index
    %c0_64 = arith.constant 0 : index
    %79 = vector.load %arg8[%c0_63, %c6, %c0_64] : memref<2x16x32xf32, #tpu.memory_space<vmem>>, vector<2x1x32xf32>
    %80 = vector.shape_cast %79 : vector<2x1x32xf32> to vector<2x32xf32>
    %c6_65 = arith.constant 6 : index
    %c0_66 = arith.constant 0 : index
    %c0_67 = arith.constant 0 : index
    %81 = vector.load %arg5[%c6_65, %c0_66, %c0_67] : memref<16x32x4xf32, #tpu.memory_space<vmem>>, vector<1x32x4xf32>
    %82 = vector.shape_cast %81 : vector<1x32x4xf32> to vector<32x4xf32>
    %cst_68 = arith.constant dense<0.000000e+00> : vector<2x4xf32>
    %83 = tpu.matmul %80, %82, %cst_68 {dimension_numbers = #tpu.dot_dimension_numbers<[1], [0], [0], [1], [0, 0, 1, 1], [], []>} : vector<2x32xf32>, vector<32x4xf32>, vector<2x4xf32> -> vector<2x4xf32>
    %84 = arith.addf %78, %83 : vector<2x4xf32>
    %c0_69 = arith.constant 0 : index
    %c7 = arith.constant 7 : index
    %c0_70 = arith.constant 0 : index
    %85 = vector.load %arg8[%c0_69, %c7, %c0_70] : memref<2x16x32xf32, #tpu.memory_space<vmem>>, vector<2x1x32xf32>
    %86 = vector.shape_cast %85 : vector<2x1x32xf32> to vector<2x32xf32>
    %c7_71 = arith.constant 7 : index
    %c0_72 = arith.constant 0 : index
    %c0_73 = arith.constant 0 : index
    %87 = vector.load %arg5[%c7_71, %c0_72, %c0_73] : memref<16x32x4xf32, #tpu.memory_space<vmem>>, vector<1x32x4xf32>
    %88 = vector.shape_cast %87 : vector<1x32x4xf32> to vector<32x4xf32>
    %cst_74 = arith.constant dense<0.000000e+00> : vector<2x4xf32>
    %89 = tpu.matmul %86, %88, %cst_74 {dimension_numbers = #tpu.dot_dimension_numbers<[1], [0], [0], [1], [0, 0, 1, 1], [], []>} : vector<2x32xf32>, vector<32x4xf32>, vector<2x4xf32> -> vector<2x4xf32>
    %90 = arith.addf %84, %89 : vector<2x4xf32>
    %c0_75 = arith.constant 0 : index
    %c8 = arith.constant 8 : index
    %c0_76 = arith.constant 0 : index
    %91 = vector.load %arg8[%c0_75, %c8, %c0_76] : memref<2x16x32xf32, #tpu.memory_space<vmem>>, vector<2x1x32xf32>
    %92 = vector.shape_cast %91 : vector<2x1x32xf32> to vector<2x32xf32>
    %c8_77 = arith.constant 8 : index
    %c0_78 = arith.constant 0 : index
    %c0_79 = arith.constant 0 : index
    %93 = vector.load %arg5[%c8_77, %c0_78, %c0_79] : memref<16x32x4xf32, #tpu.memory_space<vmem>>, vector<1x32x4xf32>
    %94 = vector.shape_cast %93 : vector<1x32x4xf32> to vector<32x4xf32>
    %cst_80 = arith.constant dense<0.000000e+00> : vector<2x4xf32>
    %95 = tpu.matmul %92, %94, %cst_80 {dimension_numbers = #tpu.dot_dimension_numbers<[1], [0], [0], [1], [0, 0, 1, 1], [], []>} : vector<2x32xf32>, vector<32x4xf32>, vector<2x4xf32> -> vector<2x4xf32>
    %96 = arith.addf %90, %95 : vector<2x4xf32>
    %c0_81 = arith.constant 0 : index
    %c9 = arith.constant 9 : index
    %c0_82 = arith.constant 0 : index
    %97 = vector.load %arg8[%c0_81, %c9, %c0_82] : memref<2x16x32xf32, #tpu.memory_space<vmem>>, vector<2x1x32xf32>
    %98 = vector.shape_cast %97 : vector<2x1x32xf32> to vector<2x32xf32>
    %c9_83 = arith.constant 9 : index
    %c0_84 = arith.constant 0 : index
    %c0_85 = arith.constant 0 : index
    %99 = vector.load %arg5[%c9_83, %c0_84, %c0_85] : memref<16x32x4xf32, #tpu.memory_space<vmem>>, vector<1x32x4xf32>
    %100 = vector.shape_cast %99 : vector<1x32x4xf32> to vector<32x4xf32>
    %cst_86 = arith.constant dense<0.000000e+00> : vector<2x4xf32>
    %101 = tpu.matmul %98, %100, %cst_86 {dimension_numbers = #tpu.dot_dimension_numbers<[1], [0], [0], [1], [0, 0, 1, 1], [], []>} : vector<2x32xf32>, vector<32x4xf32>, vector<2x4xf32> -> vector<2x4xf32>
    %102 = arith.addf %96, %101 : vector<2x4xf32>
    %c0_87 = arith.constant 0 : index
    %c10 = arith.constant 10 : index
    %c0_88 = arith.constant 0 : index
    %103 = vector.load %arg8[%c0_87, %c10, %c0_88] : memref<2x16x32xf32, #tpu.memory_space<vmem>>, vector<2x1x32xf32>
    %104 = vector.shape_cast %103 : vector<2x1x32xf32> to vector<2x32xf32>
    %c10_89 = arith.constant 10 : index
    %c0_90 = arith.constant 0 : index
    %c0_91 = arith.constant 0 : index
    %105 = vector.load %arg5[%c10_89, %c0_90, %c0_91] : memref<16x32x4xf32, #tpu.memory_space<vmem>>, vector<1x32x4xf32>
    %106 = vector.shape_cast %105 : vector<1x32x4xf32> to vector<32x4xf32>
    %cst_92 = arith.constant dense<0.000000e+00> : vector<2x4xf32>
    %107 = tpu.matmul %104, %106, %cst_92 {dimension_numbers = #tpu.dot_dimension_numbers<[1], [0], [0], [1], [0, 0, 1, 1], [], []>} : vector<2x32xf32>, vector<32x4xf32>, vector<2x4xf32> -> vector<2x4xf32>
    %108 = arith.addf %102, %107 : vector<2x4xf32>
    %c0_93 = arith.constant 0 : index
    %c11 = arith.constant 11 : index
    %c0_94 = arith.constant 0 : index
    %109 = vector.load %arg8[%c0_93, %c11, %c0_94] : memref<2x16x32xf32, #tpu.memory_space<vmem>>, vector<2x1x32xf32>
    %110 = vector.shape_cast %109 : vector<2x1x32xf32> to vector<2x32xf32>
    %c11_95 = arith.constant 11 : index
    %c0_96 = arith.constant 0 : index
    %c0_97 = arith.constant 0 : index
    %111 = vector.load %arg5[%c11_95, %c0_96, %c0_97] : memref<16x32x4xf32, #tpu.memory_space<vmem>>, vector<1x32x4xf32>
    %112 = vector.shape_cast %111 : vector<1x32x4xf32> to vector<32x4xf32>
    %cst_98 = arith.constant dense<0.000000e+00> : vector<2x4xf32>
    %113 = tpu.matmul %110, %112, %cst_98 {dimension_numbers = #tpu.dot_dimension_numbers<[1], [0], [0], [1], [0, 0, 1, 1], [], []>} : vector<2x32xf32>, vector<32x4xf32>, vector<2x4xf32> -> vector<2x4xf32>
    %114 = arith.addf %108, %113 : vector<2x4xf32>
    %c0_99 = arith.constant 0 : index
    %c12 = arith.constant 12 : index
    %c0_100 = arith.constant 0 : index
    %115 = vector.load %arg8[%c0_99, %c12, %c0_100] : memref<2x16x32xf32, #tpu.memory_space<vmem>>, vector<2x1x32xf32>
    %116 = vector.shape_cast %115 : vector<2x1x32xf32> to vector<2x32xf32>
    %c12_101 = arith.constant 12 : index
    %c0_102 = arith.constant 0 : index
    %c0_103 = arith.constant 0 : index
    %117 = vector.load %arg5[%c12_101, %c0_102, %c0_103] : memref<16x32x4xf32, #tpu.memory_space<vmem>>, vector<1x32x4xf32>
    %118 = vector.shape_cast %117 : vector<1x32x4xf32> to vector<32x4xf32>
    %cst_104 = arith.constant dense<0.000000e+00> : vector<2x4xf32>
    %119 = tpu.matmul %116, %118, %cst_104 {dimension_numbers = #tpu.dot_dimension_numbers<[1], [0], [0], [1], [0, 0, 1, 1], [], []>} : vector<2x32xf32>, vector<32x4xf32>, vector<2x4xf32> -> vector<2x4xf32>
    %120 = arith.addf %114, %119 : vector<2x4xf32>
    %c0_105 = arith.constant 0 : index
    %c13 = arith.constant 13 : index
    %c0_106 = arith.constant 0 : index
    %121 = vector.load %arg8[%c0_105, %c13, %c0_106] : memref<2x16x32xf32, #tpu.memory_space<vmem>>, vector<2x1x32xf32>
    %122 = vector.shape_cast %121 : vector<2x1x32xf32> to vector<2x32xf32>
    %c13_107 = arith.constant 13 : index
    %c0_108 = arith.constant 0 : index
    %c0_109 = arith.constant 0 : index
    %123 = vector.load %arg5[%c13_107, %c0_108, %c0_109] : memref<16x32x4xf32, #tpu.memory_space<vmem>>, vector<1x32x4xf32>
    %124 = vector.shape_cast %123 : vector<1x32x4xf32> to vector<32x4xf32>
    %cst_110 = arith.constant dense<0.000000e+00> : vector<2x4xf32>
    %125 = tpu.matmul %122, %124, %cst_110 {dimension_numbers = #tpu.dot_dimension_numbers<[1], [0], [0], [1], [0, 0, 1, 1], [], []>} : vector<2x32xf32>, vector<32x4xf32>, vector<2x4xf32> -> vector<2x4xf32>
    %126 = arith.addf %120, %125 : vector<2x4xf32>
    %c0_111 = arith.constant 0 : index
    %c14 = arith.constant 14 : index
    %c0_112 = arith.constant 0 : index
    %127 = vector.load %arg8[%c0_111, %c14, %c0_112] : memref<2x16x32xf32, #tpu.memory_space<vmem>>, vector<2x1x32xf32>
    %128 = vector.shape_cast %127 : vector<2x1x32xf32> to vector<2x32xf32>
    %c14_113 = arith.constant 14 : index
    %c0_114 = arith.constant 0 : index
    %c0_115 = arith.constant 0 : index
    %129 = vector.load %arg5[%c14_113, %c0_114, %c0_115] : memref<16x32x4xf32, #tpu.memory_space<vmem>>, vector<1x32x4xf32>
    %130 = vector.shape_cast %129 : vector<1x32x4xf32> to vector<32x4xf32>
    %cst_116 = arith.constant dense<0.000000e+00> : vector<2x4xf32>
    %131 = tpu.matmul %128, %130, %cst_116 {dimension_numbers = #tpu.dot_dimension_numbers<[1], [0], [0], [1], [0, 0, 1, 1], [], []>} : vector<2x32xf32>, vector<32x4xf32>, vector<2x4xf32> -> vector<2x4xf32>
    %132 = arith.addf %126, %131 : vector<2x4xf32>
    %c0_117 = arith.constant 0 : index
    %c15 = arith.constant 15 : index
    %c0_118 = arith.constant 0 : index
    %133 = vector.load %arg8[%c0_117, %c15, %c0_118] : memref<2x16x32xf32, #tpu.memory_space<vmem>>, vector<2x1x32xf32>
    %134 = vector.shape_cast %133 : vector<2x1x32xf32> to vector<2x32xf32>
    %c15_119 = arith.constant 15 : index
    %c0_120 = arith.constant 0 : index
    %c0_121 = arith.constant 0 : index
    %135 = vector.load %arg5[%c15_119, %c0_120, %c0_121] : memref<16x32x4xf32, #tpu.memory_space<vmem>>, vector<1x32x4xf32>
    %136 = vector.shape_cast %135 : vector<1x32x4xf32> to vector<32x4xf32>
    %cst_122 = arith.constant dense<0.000000e+00> : vector<2x4xf32>
    %137 = tpu.matmul %134, %136, %cst_122 {dimension_numbers = #tpu.dot_dimension_numbers<[1], [0], [0], [1], [0, 0, 1, 1], [], []>} : vector<2x32xf32>, vector<32x4xf32>, vector<2x4xf32> -> vector<2x4xf32>
    %138 = arith.addf %132, %137 : vector<2x4xf32>
    %c0_123 = arith.constant 0 : index
    %c0_124 = arith.constant 0 : index
    %139 = vector.load %arg6[%c0_123, %c0_124] : memref<1x4xf32, #tpu.memory_space<vmem>>, vector<1x4xf32>
    %140 = vector.broadcast %139 : vector<1x4xf32> to vector<2x4xf32>
    %141 = arith.addf %138, %140 : vector<2x4xf32>
    %c0_125 = arith.constant 0 : index
    %c0_126 = arith.constant 0 : index
    %142 = vector.load %arg7[%c0_125, %c0_126] : memref<2x4xf32, #tpu.memory_space<vmem>>, vector<2x4xf32>
    tpu.vector_store %arg7[%c0_125, %c0_126], %141 {strides = array<i32>} : memref<2x4xf32, #tpu.memory_space<vmem>>, vector<2x4xf32>,
    return
  }
  func.func @transform_0(%arg0: i32) -> (i32, i32) {
    %c0_i32 = arith.constant 0 : i32
    %c0_i32_0 = arith.constant 0 : i32
    %c0_i32_1 = arith.constant 0 : i32
    return %c0_i32, %c0_i32_0 : i32, i32
  }
  func.func @transform_1(%arg0: i32) -> (i32, i32, i32) {
    %c0_i32 = arith.constant 0 : i32
    %c0_i32_0 = arith.constant 0 : i32
    %c0_i32_1 = arith.constant 0 : i32
    return %arg0, %c0_i32, %c0_i32_0 : i32, i32, i32
  }
  func.func @transform_2(%arg0: i32) -> (i32, i32) {
    %c0_i32 = arith.constant 0 : i32
    %c0_i32_0 = arith.constant 0 : i32
    %c0_i32_1 = arith.constant 0 : i32
    return %c0_i32, %c0_i32_0 : i32, i32
  }
  func.func @transform_3(%arg0: i32) -> (i32, i32) {
    %c0_i32 = arith.constant 0 : i32
    %c0_i32_0 = arith.constant 0 : i32
    %c0_i32_1 = arith.constant 0 : i32
    return %c0_i32, %c0_i32_0 : i32, i32
  }
  func.func @transform_4(%arg0: i32) -> (i32, i32, i32) {
    %c0_i32 = arith.constant 0 : i32
    %c0_i32_0 = arith.constant 0 : i32
    %c0_i32_1 = arith.constant 0 : i32
    %c0_i32_2 = arith.constant 0 : i32
    return %c0_i32, %c0_i32_0, %c0_i32_1 : i32, i32, i32
  }
  func.func @transform_5(%arg0: i32) -> (i32, i32) {
    %c0_i32 = arith.constant 0 : i32
    %c0_i32_0 = arith.constant 0 : i32
    %c0_i32_1 = arith.constant 0 : i32
    return %c0_i32, %c0_i32_0 : i32, i32
  }
  func.func @transform_6(%arg0: i32) -> (i32, i32) {
    %c0_i32 = arith.constant 0 : i32
    %c0_i32_0 = arith.constant 0 : i32
    return %arg0, %c0_i32 : i32, i32
  }
}

</mosaic_0001>

<llo_original>
// kernel: dgcnn_forward.1
$region0: #{dgcnn_forward.1}
  #allocation0 [shape = 'u32[]', space=smem, size = 0x4, offset = 0x4, fixed_abs, tag = 'smem constant byte address 0x4 - core index']
  #allocation1 [shape = 'u32[144,128]{1,0:T(1,128)}', space=vmem, size = 0x12000, scoped, tag = 'internal scratch']
  #allocation2 [shape = 'f32[2,16,32]{2,1,0:T(8,128)}', space=vmem, size = 0x4000, scoped, tag = 'scratch operand']
  %s0 = inlined_call_operand.vmem [shape: f32[16,16], index: 0, kind: input, shape index: {}]
  %s1 = inlined_call_operand.vmem [shape: f32[2,16,8], index: 1, kind: input, shape index: {}]
  %s2 = inlined_call_operand.vmem [shape: f32[8,32], index: 2, kind: input, shape index: {}]
  %s3 = inlined_call_operand.vmem [shape: f32[1,32], index: 3, kind: input, shape index: {}]
  %s4 = inlined_call_operand.vmem [shape: f32[16,32,4], index: 4, kind: input, shape index: {}]
  %s5 = inlined_call_operand.vmem [shape: f32[1,4], index: 5, kind: input, shape index: {}]
  %s6 = inlined_call_operand.hbm [shape: f32[2,4], index: 6, kind: output, shape index: {}]
  %s7 = sld [smem:[#allocation0]]
  $region34: #{dgcnn_forward.1} parent=0
    _
  %s9 = ssub.s32 1, %s7
  %s10 = scalar_select 0, %s9, %s7
  $region1: #{dgcnn_forward.1} parent=0
    #allocation3 [shape = 'u8[1024]{0}', space=vmem, size = 0x400, scoped, tag = 'output window, operand 0, single buffered']
    #allocation4 [shape = 's32[1]{0}', space=sflag, size = 0x4, scoped, tag = 'scoped memory for dgcnn_forward.1']
    %11 = vsyncpa [#allocation4], 0
    // Predicated region
    $region2: #{dgcnn_forward.1} parent=1 // pred_check
      _
    $region3: #{dgcnn_forward.1} parent=1 // pred_check_branch
      %13 = sbr.rel (0) target = $region5
    $region4: #{dgcnn_forward.1} parent=1 // pred_region
      _
    $region5: #{dgcnn_forward.1} parent=1 // pred_fallthru
      _
    // Predicated region
    $region6: #{dgcnn_forward.1} parent=1 // pred_check
      _
    $region7: #{dgcnn_forward.1} parent=1 // pred_check_branch
      %15 = sbr.rel (0) target = $region9
    $region8: #{dgcnn_forward.1} parent=1 // pred_region
      _
    $region9: #{dgcnn_forward.1} parent=1 // pred_fallthru
      _
    // Predicated region
    $region10: #{dgcnn_forward.1} parent=1 // pred_check
      _
    $region11: #{dgcnn_forward.1} parent=1 // pred_check_branch
      %17 = sbr.rel (0) target = $region13
    $region12: #{dgcnn_forward.1} parent=1 // pred_region
      _
    $region13: #{dgcnn_forward.1} parent=1 // pred_fallthru
      _
    // Predicated region
    $region14: #{dgcnn_forward.1} parent=1 // pred_check
      _
    $region15: #{dgcnn_forward.1} parent=1 // pred_check_branch
      %19 = sbr.rel (0) target = $region17
    $region16: #{dgcnn_forward.1} parent=1 // pred_region
      _
    $region17: #{dgcnn_forward.1} parent=1 // pred_fallthru
      _
    // Predicated region
    $region18: #{dgcnn_forward.1} parent=1 // pred_check
      _
    $region19: #{dgcnn_forward.1} parent=1 // pred_check_branch
      %21 = sbr.rel (0) target = $region21
    $region20: #{dgcnn_forward.1} parent=1 // pred_region
      _
    $region21: #{dgcnn_forward.1} parent=1 // pred_fallthru
      _
    // Predicated region
    $region22: #{dgcnn_forward.1} parent=1 // pred_check
      _
    $region23: #{dgcnn_forward.1} parent=1 // pred_check_branch
      %23 = sbr.rel (0) target = $region25
    $region24: #{dgcnn_forward.1} parent=1 // pred_region
      _
    $region25: #{dgcnn_forward.1} parent=1 // pred_fallthru
      _
    %v24 = vld [vmem:[%s0] sm:$0xff]
    %v25 = vld [vmem:[%s0 + $0x8] sm:$0xff]
    %v26 = vmax.f32 %v24, 0.0
    %v27 = vmax.f32 %v25, 0.0
    %vm28 = vcmask 130048
    %v29 = vsel %vm28, %v26, 0.0
    %30 = vadd.xlane.f32.xlu0 %v29
    %v31 = vpop.xlane.xlu0 %30
    %v32 = vsel %vm28, %v27, 0.0
    %33 = vadd.xlane.f32.xlu0 %v32
    %v34 = vpop.xlane.xlu0 %33
    %v35 = vadd.f32 %v31, 1e-05
    %v36 = vadd.f32 %v34, 1e-05
    %v37 = vrsqrt.pop %v35
    %v38 = vrsqrt.pop %v36
    %v39 = vld [vmem:[%s2] sm:$0xff]
    %v40 = vld [vmem:[%s3] sm:$0x1]
    %v41 = vld [vmem:[%s1] sm:$0xff]
    %v42 = vld [vmem:[%s1 + $0x8] sm:$0xff]
    %v43 = vmul.f32 %v37, %v41
    %v44 = vmul.f32 %v38, %v42
    %v46 = vsel %vm28, %v26, 0
    %v49 = vsel %vm28, %v27, 0
    %51 = vmatprep.subr.mxu0 0.0
    %52 = vmatpush1.msra.mxu0 %v43
    %53 = vmatprep.subr.mxu0 0.0
    %54 = vmatpush1.msra.mxu0 %v44
    %55 = vmatprep.subr.mxu0 0.0
    %56 = vmatpush1.msra.mxu0 0.0
    %57 = vmatprep.subr.mxu0 0.0
    %58 = vmatpush1.msra.mxu0 0.0
    %59 = vmatprep.subr.mxu0 0.0
    %60 = vmatpush1.msra.mxu0 0.0
    %61 = vmatprep.subr.mxu0 0.0
    %62 = vmatpush1.msra.mxu0 0.0
    %63 = vmatprep.subr.mxu0 0.0
    %64 = vmatpush1.msra.mxu0 0.0
    %65 = vmatprep.subr.mxu0 0.0
    %66 = vmatpush1.msra.mxu0 0.0
    %67 = vmatprep.subr.mxu0 0.0
    %68 = vmatpush1.msra.mxu0 0.0
    %69 = vmatprep.subr.mxu0 0.0
    %70 = vmatpush1.msra.mxu0 0.0
    %71 = vmatprep.subr.mxu0 0.0
    %72 = vmatpush1.msra.mxu0 0.0
    %73 = vmatprep.subr.mxu0 0.0
    %74 = vmatpush1.msra.mxu0 0.0
    %75 = vmatprep.subr.mxu0 0.0
    %76 = vmatpush1.msra.mxu0 0.0
    %77 = vmatprep.subr.mxu0 0.0
    %78 = vmatpush1.msra.mxu0 0.0
    %79 = vmatprep.subr.mxu0 0.0
    %80 = vmatpush1.msra.mxu0 0.0
    %81 = vmatprep.subr.mxu0 0.0
    %82 = vmatpush1.msra.mxu0 0.0
    %83 = vmatprep.subr.mxu0 0.0
    %84 = vmatpush1.msra.mxu0 0.0
    %85 = vmatprep.subr.mxu0 0.0
    %86 = vmatpush1.msra.mxu0 0.0
    %87 = vmatprep.subr.mxu0 0.0
    %88 = vmatpush1.msra.mxu0 0.0
    %89 = vmatprep.subr.mxu0 0.0
    %90 = vmatpush1.msra.mxu0 0.0
    %91 = vmatprep.subr.mxu0 0.0
    %92 = vmatpush1.msra.mxu0 0.0
    %93 = vmatprep.subr.mxu0 0.0
    %94 = vmatpush1.msra.mxu0 0.0
    %95 = vmatprep.subr.mxu0 0.0
    %96 = vmatpush1.msra.mxu0 0.0
    %97 = vmatprep.subr.mxu0 0.0
    %98 = vmatpush1.msra.mxu0 0.0
    %99 = vmatprep.subr.mxu0 0.0
    %100 = vmatpush1.msra.mxu0 0.0
    %101 = vmatprep.subr.mxu0 0.0
    %102 = vmatpush1.msra.mxu0 0.0
    %103 = vmatprep.subr.mxu0 0.0
    %104 = vmatpush1.msra.mxu0 0.0
    %105 = vmatprep.subr.mxu0 0.0
    %106 = vmatpush1.msra.mxu0 0.0
    %107 = vmatprep.subr.mxu0 0.0
    %108 = vmatpush1.msra.mxu0 0.0
    %109 = vmatprep.subr.mxu0 0.0
    %110 = vmatpush1.msra.mxu0 0.0
    %111 = vmatprep.subr.mxu0 0.0
    %112 = vmatpush1.msra.mxu0 0.0
    %113 = vmatprep.subr.mxu0 0.0
    %114 = vmatpush1.msra.mxu0 0.0
    %115 = vmatprep.mubr.f32.mxu0 0.0
    %116 = vmatmul.mubr.f32.gmra.mrb[0].mxu0 %v46
    %v117 = vpop.f32.mrb[0].mxu0
    %v118 = vadd.f32 0.0, %v117
    %v119 = vpop.f32.mrb[0].mxu0
    %120 = vmatprep.mubr.f32.mxu0 0.0
    %121 = vmatmul.mubr.f32.gmra.mrb[0].mxu0 %v49
    %v122 = vpop.f32.mrb[0].mxu0
    %v123 = vadd.f32 0.0, %v122
    %v124 = vpop.f32.mrb[0].mxu0
    %125 = vdwg.mxu0
    %v126 = vmul.f32 %v37, %v118
    %v127 = vmul.f32 %v38, %v123
    %v128 = vsub.f32 %v41, %v126
    %v129 = vsub.f32 %v42, %v127
    %v131 = vlaneseq
    %v132 = vshrl.u32 %v131, 7
    %v133 = vsub.s32 0, %v132
    %v134 = vrot.slane %v40, %v133
    %vm136 = vcmask 64512
    %v138 = vsel %vm136, %v128, 0
    %v141 = vsel %vm136, %v129, 0
    %143 = vmatprep.subr.mxu0 0.0
    %144 = vmatpush1.msra.mxu0 %v39
    %145 = vmatprep.subr.mxu0 0.0
    %146 = vmatpush1.msra.mxu0 0.0
    %147 = vmatprep.subr.mxu0 0.0
    %148 = vmatpush1.msra.mxu0 0.0
    %149 = vmatprep.subr.mxu0 0.0
    %150 = vmatpush1.msra.mxu0 0.0
    %151 = vmatprep.subr.mxu0 0.0
    %152 = vmatpush1.msra.mxu0 0.0
    %153 = vmatprep.subr.mxu0 0.0
    %154 = vmatpush1.msra.mxu0 0.0
    %155 = vmatprep.subr.mxu0 0.0
    %156 = vmatpush1.msra.mxu0 0.0
    %157 = vmatprep.subr.mxu0 0.0
    %158 = vmatpush1.msra.mxu0 0.0
    %159 = vmatprep.subr.mxu0 0.0
    %160 = vmatpush1.msra.mxu0 0.0
    %161 = vmatprep.subr.mxu0 0.0
    %162 = vmatpush1.msra.mxu0 0.0
    %163 = vmatprep.subr.mxu0 0.0
    %164 = vmatpush1.msra.mxu0 0.0
    %165 = vmatprep.subr.mxu0 0.0
    %166 = vmatpush1.msra.mxu0 0.0
    %167 = vmatprep.subr.mxu0 0.0
    %168 = vmatpush1.msra.mxu0 0.0
    %169 = vmatprep.subr.mxu0 0.0
    %170 = vmatpush1.msra.mxu0 0.0
    %171 = vmatprep.subr.mxu0 0.0
    %172 = vmatpush1.msra.mxu0 0.0
    %173 = vmatprep.subr.mxu0 0.0
    %174 = vmatpush1.msra.mxu0 0.0
    %175 = vmatprep.subr.mxu0 0.0
    %176 = vmatpush1.msra.mxu0 0.0
    %177 = vmatprep.subr.mxu0 0.0
    %178 = vmatpush1.msra.mxu0 0.0
    %179 = vmatprep.subr.mxu0 0.0
    %180 = vmatpush1.msra.mxu0 0.0
    %181 = vmatprep.subr.mxu0 0.0
    %182 = vmatpush1.msra.mxu0 0.0
    %183 = vmatprep.subr.mxu0 0.0
    %184 = vmatpush1.msra.mxu0 0.0
    %185 = vmatprep.subr.mxu0 0.0
    %186 = vmatpush1.msra.mxu0 0.0
    %187 = vmatprep.subr.mxu0 0.0
    %188 = vmatpush1.msra.mxu0 0.0
    %189 = vmatprep.subr.mxu0 0.0
    %190 = vmatpush1.msra.mxu0 0.0
    %191 = vmatprep.subr.mxu0 0.0
    %192 = vmatpush1.msra.mxu0 0.0
    %193 = vmatprep.subr.mxu0 0.0
    %194 = vmatpush1.msra.mxu0 0.0
    %195 = vmatprep.subr.mxu0 0.0
    %196 = vmatpush1.msra.mxu0 0.0
    %197 = vmatprep.subr.mxu0 0.0
    %198 = vmatpush1.msra.mxu0 0.0
    %199 = vmatprep.subr.mxu0 0.0
    %200 = vmatpush1.msra.mxu0 0.0
    %201 = vmatprep.subr.mxu0 0.0
    %202 = vmatpush1.msra.mxu0 0.0
    %203 = vmatprep.subr.mxu0 0.0
    %204 = vmatpush1.msra.mxu0 0.0
    %205 = vmatprep.subr.mxu0 0.0
    %206 = vmatpush1.msra.mxu0 0.0
    %207 = vmatprep.mubr.f32.mxu0 0.0
    %208 = vmatmul.mubr.f32.gmra.mrb[0].mxu0 %v138
    %v209 = vpop.f32.mrb[0].mxu0
    %v210 = vadd.f32 %v134, %v209
    %v211 = vpop.f32.mrb[0].mxu0
    %212 = vmatprep.mubr.f32.mxu0 0.0
    %213 = vmatmul.mubr.f32.gmra.mrb[0].mxu0 %v141
    %v214 = vpop.f32.mrb[0].mxu0
    %v215 = vadd.f32 %v134, %v214
    %v216 = vpop.f32.mrb[0].mxu0
    %217 = vdwg.mxu0
    %v218 = vmax.f32 %v210, 0.0
    %v219 = vmax.f32 %v215, 0.0
    %vm220 = vcmask 261120
    %221 = vst.msk [vmem:[#allocation2] sm:$0xff] %vm220, %v218
    %222 = vst.msk [vmem:[#allocation2 + $0x8] sm:$0xff] %vm220, %v219
    %s223 = scalar_lea.vmem %s1, 16
    %v224 = vld [vmem:[%s223] sm:$0xff]
    %v225 = vld [vmem:[%s223 + $0x8] sm:$0xff]
    %v226 = vmul.f32 %v37, %v224
    %v227 = vmul.f32 %v38, %v225
    %228 = vmatprep.subr.mxu0 0.0
    %229 = vmatpush1.msra.mxu0 %v226
    %230 = vmatprep.subr.mxu0 0.0
    %231 = vmatpush1.msra.mxu0 %v227
    %232 = vmatprep.subr.mxu0 0.0
    %233 = vmatpush1.msra.mxu0 0.0
    %234 = vmatprep.subr.mxu0 0.0
    %235 = vmatpush1.msra.mxu0 0.0
    %236 = vmatprep.subr.mxu0 0.0
    %237 = vmatpush1.msra.mxu0 0.0
    %238 = vmatprep.subr.mxu0 0.0
    %239 = vmatpush1.msra.mxu0 0.0
    %240 = vmatprep.subr.mxu0 0.0
    %241 = vmatpush1.msra.mxu0 0.0
    %242 = vmatprep.subr.mxu0 0.0
    %243 = vmatpush1.msra.mxu0 0.0
    %244 = vmatprep.subr.mxu0 0.0
    %245 = vmatpush1.msra.mxu0 0.0
    %246 = vmatprep.subr.mxu0 0.0
    %247 = vmatpush1.msra.mxu0 0.0
    %248 = vmatprep.subr.mxu0 0.0
    %249 = vmatpush1.msra.mxu0 0.0
    %250 = vmatprep.subr.mxu0 0.0
    %251 = vmatpush1.msra.mxu0 0.0
    %252 = vmatprep.subr.mxu0 0.0
    %253 = vmatpush1.msra.mxu0 0.0
    %254 = vmatprep.subr.mxu0 0.0
    %255 = vmatpush1.msra.mxu0 0.0
    %256 = vmatprep.subr.mxu0 0.0
    %257 = vmatpush1.msra.mxu0 0.0
    %258 = vmatprep.subr.mxu0 0.0
    %259 = vmatpush1.msra.mxu0 0.0
    %260 = vmatprep.subr.mxu0 0.0
    %261 = vmatpush1.msra.mxu0 0.0
    %262 = vmatprep.subr.mxu0 0.0
    %263 = vmatpush1.msra.mxu0 0.0
    %264 = vmatprep.subr.mxu0 0.0
    %265 = vmatpush1.msra.mxu0 0.0
    %266 = vmatprep.subr.mxu0 0.0
    %267 = vmatpush1.msra.mxu0 0.0
    %268 = vmatprep.subr.mxu0 0.0
    %269 = vmatpush1.msra.mxu0 0.0
    %270 = vmatprep.subr.mxu0 0.0
    %271 = vmatpush1.msra.mxu0 0.0
    %272 = vmatprep.subr.mxu0 0.0
    %273 = vmatpush1.msra.mxu0 0.0
    %274 = vmatprep.subr.mxu0 0.0
    %275 = vmatpush1.msra.mxu0 0.0
    %276 = vmatprep.subr.mxu0 0.0
    %277 = vmatpush1.msra.mxu0 0.0
    %278 = vmatprep.subr.mxu0 0.0
    %279 = vmatpush1.msra.mxu0 0.0
    %280 = vmatprep.subr.mxu0 0.0
    %281 = vmatpush1.msra.mxu0 0.0
    %282 = vmatprep.subr.mxu0 0.0
    %283 = vmatpush1.msra.mxu0 0.0
    %284 = vmatprep.subr.mxu0 0.0
    %285 = vmatpush1.msra.mxu0 0.0
    %286 = vmatprep.subr.mxu0 0.0
    %287 = vmatpush1.msra.mxu0 0.0
    %288 = vmatprep.subr.mxu0 0.0
    %289 = vmatpush1.msra.mxu0 0.0
    %290 = vmatprep.subr.mxu0 0.0
    %291 = vmatpush1.msra.mxu0 0.0
    %292 = vmatprep.mubr.f32.mxu0 0.0
    %293 = vmatmul.mubr.f32.gmra.mrb[0].mxu0 %v46
    %v294 = vpop.f32.mrb[0].mxu0
    %v295 = vadd.f32 0.0, %v294
    %v296 = vpop.f32.mrb[0].mxu0
    %297 = vmatprep.mubr.f32.mxu0 0.0
    %298 = vmatmul.mubr.f32.gmra.mrb[0].mxu0 %v49
    %v299 = vpop.f32.mrb[0].mxu0
    %v300 = vadd.f32 0.0, %v299
    %v301 = vpop.f32.mrb[0].mxu0
    %302 = vdwg.mxu0
    %v303 = vmul.f32 %v37, %v295
    %v304 = vmul.f32 %v38, %v300
    %v305 = vsub.f32 %v224, %v303
    %v306 = vsub.f32 %v225, %v304
    %v308 = vsel %vm136, %v305, 0
    %v311 = vsel %vm136, %v306, 0
    %313 = vmatprep.subr.mxu0 0.0
    %314 = vmatpush1.msra.mxu0 %v39
    %315 = vmatprep.subr.mxu0 0.0
    %316 = vmatpush1.msra.mxu0 0.0
    %317 = vmatprep.subr.mxu0 0.0
    %318 = vmatpush1.msra.mxu0 0.0
    %319 = vmatprep.subr.mxu0 0.0
    %320 = vmatpush1.msra.mxu0 0.0
    %321 = vmatprep.subr.mxu0 0.0
    %322 = vmatpush1.msra.mxu0 0.0
    %323 = vmatprep.subr.mxu0 0.0
    %324 = vmatpush1.msra.mxu0 0.0
    %325 = vmatprep.subr.mxu0 0.0
    %326 = vmatpush1.msra.mxu0 0.0
    %327 = vmatprep.subr.mxu0 0.0
    %328 = vmatpush1.msra.mxu0 0.0
    %329 = vmatprep.subr.mxu0 0.0
    %330 = vmatpush1.msra.mxu0 0.0
    %331 = vmatprep.subr.mxu0 0.0
    %332 = vmatpush1.msra.mxu0 0.0
    %333 = vmatprep.subr.mxu0 0.0
    %334 = vmatpush1.msra.mxu0 0.0
    %335 = vmatprep.subr.mxu0 0.0
    %336 = vmatpush1.msra.mxu0 0.0
    %337 = vmatprep.subr.mxu0 0.0
    %338 = vmatpush1.msra.mxu0 0.0
    %339 = vmatprep.subr.mxu0 0.0
    %340 = vmatpush1.msra.mxu0 0.0
    %341 = vmatprep.subr.mxu0 0.0
    %342 = vmatpush1.msra.mxu0 0.0
    %343 = vmatprep.subr.mxu0 0.0
    %344 = vmatpush1.msra.mxu0 0.0
    %345 = vmatprep.subr.mxu0 0.0
    %346 = vmatpush1.msra.mxu0 0.0
    %347 = vmatprep.subr.mxu0 0.0
    %348 = vmatpush1.msra.mxu0 0.0
    %349 = vmatprep.subr.mxu0 0.0
    %350 = vmatpush1.msra.mxu0 0.0
    %351 = vmatprep.subr.mxu0 0.0
    %352 = vmatpush1.msra.mxu0 0.0
    %353 = vmatprep.subr.mxu0 0.0
    %354 = vmatpush1.msra.mxu0 0.0
    %355 = vmatprep.subr.mxu0 0.0
    %356 = vmatpush1.msra.mxu0 0.0
    %357 = vmatprep.subr.mxu0 0.0
    %358 = vmatpush1.msra.mxu0 0.0
    %359 = vmatprep.subr.mxu0 0.0
    %360 = vmatpush1.msra.mxu0 0.0
    %361 = vmatprep.subr.mxu0 0.0
    %362 = vmatpush1.msra.mxu0 0.0
    %363 = vmatprep.subr.mxu0 0.0
    %364 = vmatpush1.msra.mxu0 0.0
    %365 = vmatprep.subr.mxu0 0.0
    %366 = vmatpush1.msra.mxu0 0.0
    %367 = vmatprep.subr.mxu0 0.0
    %368 = vmatpush1.msra.mxu0 0.0
    %369 = vmatprep.subr.mxu0 0.0
    %370 = vmatpush1.msra.mxu0 0.0
    %371 = vmatprep.subr.mxu0 0.0
    %372 = vmatpush1.msra.mxu0 0.0
    %373 = vmatprep.subr.mxu0 0.0
    %374 = vmatpush1.msra.mxu0 0.0
    %375 = vmatprep.subr.mxu0 0.0
    %376 = vmatpush1.msra.mxu0 0.0
    %377 = vmatprep.mubr.f32.mxu0 0.0
    %378 = vmatmul.mubr.f32.gmra.mrb[0].mxu0 %v308
    %v379 = vpop.f32.mrb[0].mxu0
    %v380 = vadd.f32 %v134, %v379
    %v381 = vpop.f32.mrb[0].mxu0
    %382 = vmatprep.mubr.f32.mxu0 0.0
    %383 = vmatmul.mubr.f32.gmra.mrb[0].mxu0 %v311
    %v384 = vpop.f32.mrb[0].mxu0
    %v385 = vadd.f32 %v134, %v384
    %v386 = vpop.f32.mrb[0].mxu0
    %387 = vdwg.mxu0
    %v388 = vmax.f32 %v380, 0.0
    %v389 = vmax.f32 %v385, 0.0
    %s390 = scalar_lea.vmem [#allocation2], 16
    %391 = vst.msk [vmem:[%s390] sm:$0xff] %vm220, %v388
    %392 = vst.msk [vmem:[%s390 + $0x8] sm:$0xff] %vm220, %v389
    %v393 = vld [vmem:[#allocation2] sm:$0x1]
    %v394 = vld [vmem:[#allocation2 + $0x10] sm:$0x1]
    %v395 = vld [vmem:[%s4] sm:$0xff]
    %v396 = vld [vmem:[%s4 + $0x8] sm:$0xff]
    %v397 = vld [vmem:[%s4 + $0x10] sm:$0xff]
    %v398 = vld [vmem:[%s4 + $0x18] sm:$0xff]
    %v399 = vld [vmem:[#allocation2 + $0x1] sm:$0x1]
    %v400 = vld [vmem:[#allocation2 + $0x11] sm:$0x1]
    %s401 = scalar_lea.vmem %s4, 32
    %v402 = vld [vmem:[%s401] sm:$0xff]
    %v403 = vld [vmem:[%s401 + $0x8] sm:$0xff]
    %v404 = vld [vmem:[%s401 + $0x10] sm:$0xff]
    %v405 = vld [vmem:[%s401 + $0x18] sm:$0xff]
    %v408 = vrot.slane %v400, 7
    %vm409 = vcmask 1041409
    %v410 = vsel %vm409, %v408, %v399
    %v411 = vsel %vm220, %v410, 0
    %413 = vmatprep.subr.mxu0 0.0
    %414 = vmatpush1.msra.mxu0 %v402
    %415 = vmatprep.subr.mxu0 0.0
    %416 = vmatpush1.msra.mxu0 %v403
    %417 = vmatprep.subr.mxu0 0.0
    %418 = vmatpush1.msra.mxu0 %v404
    %419 = vmatprep.subr.mxu0 0.0
    %420 = vmatpush1.msra.mxu0 %v405
    %421 = vmatprep.subr.mxu0 0.0
    %422 = vmatpush1.msra.mxu0 0.0
    %423 = vmatprep.subr.mxu0 0.0
    %424 = vmatpush1.msra.mxu0 0.0
    %425 = vmatprep.subr.mxu0 0.0
    %426 = vmatpush1.msra.mxu0 0.0
    %427 = vmatprep.subr.mxu0 0.0
    %428 = vmatpush1.msra.mxu0 0.0
    %429 = vmatprep.subr.mxu0 0.0
    %430 = vmatpush1.msra.mxu0 0.0
    %431 = vmatprep.subr.mxu0 0.0
    %432 = vmatpush1.msra.mxu0 0.0
    %433 = vmatprep.subr.mxu0 0.0
    %434 = vmatpush1.msra.mxu0 0.0
    %435 = vmatprep.subr.mxu0 0.0
    %436 = vmatpush1.msra.mxu0 0.0
    %437 = vmatprep.subr.mxu0 0.0
    %438 = vmatpush1.msra.mxu0 0.0
    %439 = vmatprep.subr.mxu0 0.0
    %440 = vmatpush1.msra.mxu0 0.0
    %441 = vmatprep.subr.mxu0 0.0
    %442 = vmatpush1.msra.mxu0 0.0
    %443 = vmatprep.subr.mxu0 0.0
    %444 = vmatpush1.msra.mxu0 0.0
    %445 = vmatprep.subr.mxu0 0.0
    %446 = vmatpush1.msra.mxu0 0.0
    %447 = vmatprep.subr.mxu0 0.0
    %448 = vmatpush1.msra.mxu0 0.0
    %449 = vmatprep.subr.mxu0 0.0
    %450 = vmatpush1.msra.mxu0 0.0
    %451 = vmatprep.subr.mxu0 0.0
    %452 = vmatpush1.msra.mxu0 0.0
    %453 = vmatprep.subr.mxu0 0.0
    %454 = vmatpush1.msra.mxu0 0.0
    %455 = vmatprep.subr.mxu0 0.0
    %456 = vmatpush1.msra.mxu0 0.0
    %457 = vmatprep.subr.mxu0 0.0
    %458 = vmatpush1.msra.mxu0 0.0
    %459 = vmatprep.subr.mxu0 0.0
    %460 = vmatpush1.msra.mxu0 0.0
    %461 = vmatprep.subr.mxu0 0.0
    %462 = vmatpush1.msra.mxu0 0.0
    %463 = vmatprep.subr.mxu0 0.0
    %464 = vmatpush1.msra.mxu0 0.0
    %465 = vmatprep.subr.mxu0 0.0
    %466 = vmatpush1.msra.mxu0 0.0
    %467 = vmatprep.subr.mxu0 0.0
    %468 = vmatpush1.msra.mxu0 0.0
    %469 = vmatprep.subr.mxu0 0.0
    %470 = vmatpush1.msra.mxu0 0.0
    %471 = vmatprep.subr.mxu0 0.0
    %472 = vmatpush1.msra.mxu0 0.0
    %473 = vmatprep.subr.mxu0 0.0
    %474 = vmatpush1.msra.mxu0 0.0
    %475 = vmatprep.subr.mxu0 0.0
    %476 = vmatpush1.msra.mxu0 0.0
    %477 = vmatprep.mubr.f32.mxu0 0.0
    %478 = vmatmul.mubr.f32.gmra.mrb[0].mxu0 %v411
    %v479 = vpop.f32.mrb[0].mxu0
    %v480 = vadd.f32 0.0, %v479
    %v481 = vpop.f32.mrb[0].mxu0
    %482 = vdwg.mxu0
    %v485 = vrot.slane %v394, 7
    %v486 = vsel %vm409, %v485, %v393
    %v487 = vsel %vm220, %v486, 0
    %489 = vmatprep.subr.mxu0 0.0
    %490 = vmatpush1.msra.mxu0 %v395
    %491 = vmatprep.subr.mxu0 0.0
    %492 = vmatpush1.msra.mxu0 %v396
    %493 = vmatprep.subr.mxu0 0.0
    %494 = vmatpush1.msra.mxu0 %v397
    %495 = vmatprep.subr.mxu0 0.0
    %496 = vmatpush1.msra.mxu0 %v398
    %497 = vmatprep.subr.mxu0 0.0
    %498 = vmatpush1.msra.mxu0 0.0
    %499 = vmatprep.subr.mxu0 0.0
    %500 = vmatpush1.msra.mxu0 0.0
    %501 = vmatprep.subr.mxu0 0.0
    %502 = vmatpush1.msra.mxu0 0.0
    %503 = vmatprep.subr.mxu0 0.0
    %504 = vmatpush1.msra.mxu0 0.0
    %505 = vmatprep.subr.mxu0 0.0
    %506 = vmatpush1.msra.mxu0 0.0
    %507 = vmatprep.subr.mxu0 0.0
    %508 = vmatpush1.msra.mxu0 0.0
    %509 = vmatprep.subr.mxu0 0.0
    %510 = vmatpush1.msra.mxu0 0.0
    %511 = vmatprep.subr.mxu0 0.0
    %512 = vmatpush1.msra.mxu0 0.0
    %513 = vmatprep.subr.mxu0 0.0
    %514 = vmatpush1.msra.mxu0 0.0
    %515 = vmatprep.subr.mxu0 0.0
    %516 = vmatpush1.msra.mxu0 0.0
    %517 = vmatprep.subr.mxu0 0.0
    %518 = vmatpush1.msra.mxu0 0.0
    %519 = vmatprep.subr.mxu0 0.0
    %520 = vmatpush1.msra.mxu0 0.0
    %521 = vmatprep.subr.mxu0 0.0
    %522 = vmatpush1.msra.mxu0 0.0
    %523 = vmatprep.subr.mxu0 0.0
    %524 = vmatpush1.msra.mxu0 0.0
    %525 = vmatprep.subr.mxu0 0.0
    %526 = vmatpush1.msra.mxu0 0.0
    %527 = vmatprep.subr.mxu0 0.0
    %528 = vmatpush1.msra.mxu0 0.0
    %529 = vmatprep.subr.mxu0 0.0
    %530 = vmatpush1.msra.mxu0 0.0
    %531 = vmatprep.subr.mxu0 0.0
    %532 = vmatpush1.msra.mxu0 0.0
    %533 = vmatprep.subr.mxu0 0.0
    %534 = vmatpush1.msra.mxu0 0.0
    %535 = vmatprep.subr.mxu0 0.0
    %536 = vmatpush1.msra.mxu0 0.0
    %537 = vmatprep.subr.mxu0 0.0
    %538 = vmatpush1.msra.mxu0 0.0
    %539 = vmatprep.subr.mxu0 0.0
    %540 = vmatpush1.msra.mxu0 0.0
    %541 = vmatprep.subr.mxu0 0.0
    %542 = vmatpush1.msra.mxu0 0.0
    %543 = vmatprep.subr.mxu0 0.0
    %544 = vmatpush1.msra.mxu0 0.0
    %545 = vmatprep.subr.mxu0 0.0
    %546 = vmatpush1.msra.mxu0 0.0
    %547 = vmatprep.subr.mxu0 0.0
    %548 = vmatpush1.msra.mxu0 0.0
    %549 = vmatprep.subr.mxu0 0.0
    %550 = vmatpush1.msra.mxu0 0.0
    %551 = vmatprep.subr.mxu0 0.0
    %552 = vmatpush1.msra.mxu0 0.0
    %553 = vmatprep.mubr.f32.mxu0 0.0
    %554 = vmatmul.mubr.f32.gmra.mrb[0].mxu0 %v487
    %v555 = vpop.f32.mrb[0].mxu0
    %v556 = vadd.f32 %v480, %v555
    %v557 = vpop.f32.mrb[0].mxu0
    %558 = vdwg.mxu0
    %v559 = vld [vmem:[#allocation2 + $0x2] sm:$0x1]
    %v560 = vld [vmem:[#allocation2 + $0x12] sm:$0x1]
    %s561 = scalar_lea.vmem %s4, 64
    %v562 = vld [vmem:[%s561] sm:$0xff]
    %v563 = vld [vmem:[%s561 + $0x8] sm:$0xff]
    %v564 = vld [vmem:[%s561 + $0x10] sm:$0xff]
    %v565 = vld [vmem:[%s561 + $0x18] sm:$0xff]
    %v568 = vrot.slane %v560, 7
    %v569 = vsel %vm409, %v568, %v559
    %v570 = vsel %vm220, %v569, 0
    %572 = vmatprep.subr.mxu0 0.0
    %573 = vmatpush1.msra.mxu0 %v562
    %574 = vmatprep.subr.mxu0 0.0
    %575 = vmatpush1.msra.mxu0 %v563
    %576 = vmatprep.subr.mxu0 0.0
    %577 = vmatpush1.msra.mxu0 %v564
    %578 = vmatprep.subr.mxu0 0.0
    %579 = vmatpush1.msra.mxu0 %v565
    %580 = vmatprep.subr.mxu0 0.0
    %581 = vmatpush1.msra.mxu0 0.0
    %582 = vmatprep.subr.mxu0 0.0
    %583 = vmatpush1.msra.mxu0 0.0
    %584 = vmatprep.subr.mxu0 0.0
    %585 = vmatpush1.msra.mxu0 0.0
    %586 = vmatprep.subr.mxu0 0.0
    %587 = vmatpush1.msra.mxu0 0.0
    %588 = vmatprep.subr.mxu0 0.0
    %589 = vmatpush1.msra.mxu0 0.0
    %590 = vmatprep.subr.mxu0 0.0
    %591 = vmatpush1.msra.mxu0 0.0
    %592 = vmatprep.subr.mxu0 0.0
    %593 = vmatpush1.msra.mxu0 0.0
    %594 = vmatprep.subr.mxu0 0.0
    %595 = vmatpush1.msra.mxu0 0.0
    %596 = vmatprep.subr.mxu0 0.0
    %597 = vmatpush1.msra.mxu0 0.0
    %598 = vmatprep.subr.mxu0 0.0
    %599 = vmatpush1.msra.mxu0 0.0
    %600 = vmatprep.subr.mxu0 0.0
    %601 = vmatpush1.msra.mxu0 0.0
    %602 = vmatprep.subr.mxu0 0.0
    %603 = vmatpush1.msra.mxu0 0.0
    %604 = vmatprep.subr.mxu0 0.0
    %605 = vmatpush1.msra.mxu0 0.0
    %606 = vmatprep.subr.mxu0 0.0
    %607 = vmatpush1.msra.mxu0 0.0
    %608 = vmatprep.subr.mxu0 0.0
    %609 = vmatpush1.msra.mxu0 0.0
    %610 = vmatprep.subr.mxu0 0.0
    %611 = vmatpush1.msra.mxu0 0.0
    %612 = vmatprep.subr.mxu0 0.0
    %613 = vmatpush1.msra.mxu0 0.0
    %614 = vmatprep.subr.mxu0 0.0
    %615 = vmatpush1.msra.mxu0 0.0
    %616 = vmatprep.subr.mxu0 0.0
    %617 = vmatpush1.msra.mxu0 0.0
    %618 = vmatprep.subr.mxu0 0.0
    %619 = vmatpush1.msra.mxu0 0.0
    %620 = vmatprep.subr.mxu0 0.0
    %621 = vmatpush1.msra.mxu0 0.0
    %622 = vmatprep.subr.mxu0 0.0
    %623 = vmatpush1.msra.mxu0 0.0
    %624 = vmatprep.subr.mxu0 0.0
    %625 = vmatpush1.msra.mxu0 0.0
    %626 = vmatprep.subr.mxu0 0.0
    %627 = vmatpush1.msra.mxu0 0.0
    %628 = vmatprep.subr.mxu0 0.0
    %629 = vmatpush1.msra.mxu0 0.0
    %630 = vmatprep.subr.mxu0 0.0
    %631 = vmatpush1.msra.mxu0 0.0
    %632 = vmatprep.subr.mxu0 0.0
    %633 = vmatpush1.msra.mxu0 0.0
    %634 = vmatprep.subr.mxu0 0.0
    %635 = vmatpush1.msra.mxu0 0.0
    %636 = vmatprep.mubr.f32.mxu0 0.0
    %637 = vmatmul.mubr.f32.gmra.mrb[0].mxu0 %v570
    %v638 = vpop.f32.mrb[0].mxu0
    %v639 = vadd.f32 0.0, %v638
    %v640 = vpop.f32.mrb[0].mxu0
    %641 = vdwg.mxu0
    %v642 = vadd.f32 %v556, %v639
    %v643 = vld [vmem:[#allocation2 + $0x3] sm:$0x1]
    %v644 = vld [vmem:[#allocation2 + $0x13] sm:$0x1]
    %s645 = scalar_lea.vmem %s4, 96
    %v646 = vld [vmem:[%s645] sm:$0xff]
    %v647 = vld [vmem:[%s645 + $0x8] sm:$0xff]
    %v648 = vld [vmem:[%s645 + $0x10] sm:$0xff]
    %v649 = vld [vmem:[%s645 + $0x18] sm:$0xff]
    %v652 = vrot.slane %v644, 7
    %v653 = vsel %vm409, %v652, %v643
    %v654 = vsel %vm220, %v653, 0
    %656 = vmatprep.subr.mxu0 0.0
    %657 = vmatpush1.msra.mxu0 %v646
    %658 = vmatprep.subr.mxu0 0.0
    %659 = vmatpush1.msra.mxu0 %v647
    %660 = vmatprep.subr.mxu0 0.0
    %661 = vmatpush1.msra.mxu0 %v648
    %662 = vmatprep.subr.mxu0 0.0
    %663 = vmatpush1.msra.mxu0 %v649
    %664 = vmatprep.subr.mxu0 0.0
    %665 = vmatpush1.msra.mxu0 0.0
    %666 = vmatprep.subr.mxu0 0.0
    %667 = vmatpush1.msra.mxu0 0.0
    %668 = vmatprep.subr.mxu0 0.0
    %669 = vmatpush1.msra.mxu0 0.0
    %670 = vmatprep.subr.mxu0 0.0
    %671 = vmatpush1.msra.mxu0 0.0
    %672 = vmatprep.subr.mxu0 0.0
    %673 = vmatpush1.msra.mxu0 0.0
    %674 = vmatprep.subr.mxu0 0.0
    %675 = vmatpush1.msra.mxu0 0.0
    %676 = vmatprep.subr.mxu0 0.0
    %677 = vmatpush1.msra.mxu0 0.0
    %678 = vmatprep.subr.mxu0 0.0
    %679 = vmatpush1.msra.mxu0 0.0
    %680 = vmatprep.subr.mxu0 0.0
    %681 = vmatpush1.msra.mxu0 0.0
    %682 = vmatprep.subr.mxu0 0.0
    %683 = vmatpush1.msra.mxu0 0.0
    %684 = vmatprep.subr.mxu0 0.0
    %685 = vmatpush1.msra.mxu0 0.0
    %686 = vmatprep.subr.mxu0 0.0
    %687 = vmatpush1.msra.mxu0 0.0
    %688 = vmatprep.subr.mxu0 0.0
    %689 = vmatpush1.msra.mxu0 0.0
    %690 = vmatprep.subr.mxu0 0.0
    %691 = vmatpush1.msra.mxu0 0.0
    %692 = vmatprep.subr.mxu0 0.0
    %693 = vmatpush1.msra.mxu0 0.0
    %694 = vmatprep.subr.mxu0 0.0
    %695 = vmatpush1.msra.mxu0 0.0
    %696 = vmatprep.subr.mxu0 0.0
    %697 = vmatpush1.msra.mxu0 0.0
    %698 = vmatprep.subr.mxu0 0.0
    %699 = vmatpush1.msra.mxu0 0.0
    %700 = vmatprep.subr.mxu0 0.0
    %701 = vmatpush1.msra.mxu0 0.0
    %702 = vmatprep.subr.mxu0 0.0
    %703 = vmatpush1.msra.mxu0 0.0
    %704 = vmatprep.subr.mxu0 0.0
    %705 = vmatpush1.msra.mxu0 0.0
    %706 = vmatprep.subr.mxu0 0.0
    %707 = vmatpush1.msra.mxu0 0.0
    %708 = vmatprep.subr.mxu0 0.0
    %709 = vmatpush1.msra.mxu0 0.0
    %710 = vmatprep.subr.mxu0 0.0
    %711 = vmatpush1.msra.mxu0 0.0
    %712 = vmatprep.subr.mxu0 0.0
    %713 = vmatpush1.msra.mxu0 0.0
    %714 = vmatprep.subr.mxu0 0.0
    %715 = vmatpush1.msra.mxu0 0.0
    %716 = vmatprep.subr.mxu0 0.0
    %717 = vmatpush1.msra.mxu0 0.0
    %718 = vmatprep.subr.mxu0 0.0
    %719 = vmatpush1.msra.mxu0 0.0
    %720 = vmatprep.mubr.f32.mxu0 0.0
    %721 = vmatmul.mubr.f32.gmra.mrb[0].mxu0 %v654
    %v722 = vpop.f32.mrb[0].mxu0
    %v723 = vadd.f32 0.0, %v722
    %v724 = vpop.f32.mrb[0].mxu0
    %725 = vdwg.mxu0
    %v726 = vadd.f32 %v642, %v723
    %v727 = vld [vmem:[#allocation2 + $0x4] sm:$0x1]
    %v728 = vld [vmem:[#allocation2 + $0x14] sm:$0x1]
    %s729 = scalar_lea.vmem %s4, 128
    %v730 = vld [vmem:[%s729] sm:$0xff]
    %v731 = vld [vmem:[%s729 + $0x8] sm:$0xff]
    %v732 = vld [vmem:[%s729 + $0x10] sm:$0xff]
    %v733 = vld [vmem:[%s729 + $0x18] sm:$0xff]
    %v736 = vrot.slane %v728, 7
    %v737 = vsel %vm409, %v736, %v727
    %v738 = vsel %vm220, %v737, 0
    %740 = vmatprep.subr.mxu0 0.0
    %741 = vmatpush1.msra.mxu0 %v730
    %742 = vmatprep.subr.mxu0 0.0
    %743 = vmatpush1.msra.mxu0 %v731
    %744 = vmatprep.subr.mxu0 0.0
    %745 = vmatpush1.msra.mxu0 %v732
    %746 = vmatprep.subr.mxu0 0.0
    %747 = vmatpush1.msra.mxu0 %v733
    %748 = vmatprep.subr.mxu0 0.0
    %749 = vmatpush1.msra.mxu0 0.0
    %750 = vmatprep.subr.mxu0 0.0
    %751 = vmatpush1.msra.mxu0 0.0
    %752 = vmatprep.subr.mxu0 0.0
    %753 = vmatpush1.msra.mxu0 0.0
    %754 = vmatprep.subr.mxu0 0.0
    %755 = vmatpush1.msra.mxu0 0.0
    %756 = vmatprep.subr.mxu0 0.0
    %757 = vmatpush1.msra.mxu0 0.0
    %758 = vmatprep.subr.mxu0 0.0
    %759 = vmatpush1.msra.mxu0 0.0
    %760 = vmatprep.subr.mxu0 0.0
    %761 = vmatpush1.msra.mxu0 0.0
    %762 = vmatprep.subr.mxu0 0.0
    %763 = vmatpush1.msra.mxu0 0.0
    %764 = vmatprep.subr.mxu0 0.0
    %765 = vmatpush1.msra.mxu0 0.0
    %766 = vmatprep.subr.mxu0 0.0
    %767 = vmatpush1.msra.mxu0 0.0
    %768 = vmatprep.subr.mxu0 0.0
    %769 = vmatpush1.msra.mxu0 0.0
    %770 = vmatprep.subr.mxu0 0.0
    %771 = vmatpush1.msra.mxu0 0.0
    %772 = vmatprep.subr.mxu0 0.0
    %773 = vmatpush1.msra.mxu0 0.0
    %774 = vmatprep.subr.mxu0 0.0
    %775 = vmatpush1.msra.mxu0 0.0
    %776 = vmatprep.subr.mxu0 0.0
    %777 = vmatpush1.msra.mxu0 0.0
    %778 = vmatprep.subr.mxu0 0.0
    %779 = vmatpush1.msra.mxu0 0.0
    %780 = vmatprep.subr.mxu0 0.0
    %781 = vmatpush1.msra.mxu0 0.0
    %782 = vmatprep.subr.mxu0 0.0
    %783 = vmatpush1.msra.mxu0 0.0
    %784 = vmatprep.subr.mxu0 0.0
    %785 = vmatpush1.msra.mxu0 0.0
    %786 = vmatprep.subr.mxu0 0.0
    %787 = vmatpush1.msra.mxu0 0.0
    %788 = vmatprep.subr.mxu0 0.0
    %789 = vmatpush1.msra.mxu0 0.0
    %790 = vmatprep.subr.mxu0 0.0
    %791 = vmatpush1.msra.mxu0 0.0
    %792 = vmatprep.subr.mxu0 0.0
    %793 = vmatpush1.msra.mxu0 0.0
    %794 = vmatprep.subr.mxu0 0.0
    %795 = vmatpush1.msra.mxu0 0.0
    %796 = vmatprep.subr.mxu0 0.0
    %797 = vmatpush1.msra.mxu0 0.0
    %798 = vmatprep.subr.mxu0 0.0
    %799 = vmatpush1.msra.mxu0 0.0
    %800 = vmatprep.subr.mxu0 0.0
    %801 = vmatpush1.msra.mxu0 0.0
    %802 = vmatprep.subr.mxu0 0.0
    %803 = vmatpush1.msra.mxu0 0.0
    %804 = vmatprep.mubr.f32.mxu0 0.0
    %805 = vmatmul.mubr.f32.gmra.mrb[0].mxu0 %v738
    %v806 = vpop.f32.mrb[0].mxu0
    %v807 = vadd.f32 0.0, %v806
    %v808 = vpop.f32.mrb[0].mxu0
    %809 = vdwg.mxu0
    %v810 = vadd.f32 %v726, %v807
    %v811 = vld [vmem:[#allocation2 + $0x5] sm:$0x1]
    %v812 = vld [vmem:[#allocation2 + $0x15] sm:$0x1]
    %s813 = scalar_lea.vmem %s4, 160
    %v814 = vld [vmem:[%s813] sm:$0xff]
    %v815 = vld [vmem:[%s813 + $0x8] sm:$0xff]
    %v816 = vld [vmem:[%s813 + $0x10] sm:$0xff]
    %v817 = vld [vmem:[%s813 + $0x18] sm:$0xff]
    %v820 = vrot.slane %v812, 7
    %v821 = vsel %vm409, %v820, %v811
    %v822 = vsel %vm220, %v821, 0
    %824 = vmatprep.subr.mxu0 0.0
    %825 = vmatpush1.msra.mxu0 %v814
    %826 = vmatprep.subr.mxu0 0.0
    %827 = vmatpush1.msra.mxu0 %v815
    %828 = vmatprep.subr.mxu0 0.0
    %829 = vmatpush1.msra.mxu0 %v816
    %830 = vmatprep.subr.mxu0 0.0
    %831 = vmatpush1.msra.mxu0 %v817
    %832 = vmatprep.subr.mxu0 0.0
    %833 = vmatpush1.msra.mxu0 0.0
    %834 = vmatprep.subr.mxu0 0.0
    %835 = vmatpush1.msra.mxu0 0.0
    %836 = vmatprep.subr.mxu0 0.0
    %837 = vmatpush1.msra.mxu0 0.0
    %838 = vmatprep.subr.mxu0 0.0
    %839 = vmatpush1.msra.mxu0 0.0
    %840 = vmatprep.subr.mxu0 0.0
    %841 = vmatpush1.msra.mxu0 0.0
    %842 = vmatprep.subr.mxu0 0.0
    %843 = vmatpush1.msra.mxu0 0.0
    %844 = vmatprep.subr.mxu0 0.0
    %845 = vmatpush1.msra.mxu0 0.0
    %846 = vmatprep.subr.mxu0 0.0
    %847 = vmatpush1.msra.mxu0 0.0
    %848 = vmatprep.subr.mxu0 0.0
    %849 = vmatpush1.msra.mxu0 0.0
    %850 = vmatprep.subr.mxu0 0.0
    %851 = vmatpush1.msra.mxu0 0.0
    %852 = vmatprep.subr.mxu0 0.0
    %853 = vmatpush1.msra.mxu0 0.0
    %854 = vmatprep.subr.mxu0 0.0
    %855 = vmatpush1.msra.mxu0 0.0
    %856 = vmatprep.subr.mxu0 0.0
    %857 = vmatpush1.msra.mxu0 0.0
    %858 = vmatprep.subr.mxu0 0.0
    %859 = vmatpush1.msra.mxu0 0.0
    %860 = vmatprep.subr.mxu0 0.0
    %861 = vmatpush1.msra.mxu0 0.0
    %862 = vmatprep.subr.mxu0 0.0
    %863 = vmatpush1.msra.mxu0 0.0
    %864 = vmatprep.subr.mxu0 0.0
    %865 = vmatpush1.msra.mxu0 0.0
    %866 = vmatprep.subr.mxu0 0.0
    %867 = vmatpush1.msra.mxu0 0.0
    %868 = vmatprep.subr.mxu0 0.0
    %869 = vmatpush1.msra.mxu0 0.0
    %870 = vmatprep.subr.mxu0 0.0
    %871 = vmatpush1.msra.mxu0 0.0
    %872 = vmatprep.subr.mxu0 0.0
    %873 = vmatpush1.msra.mxu0 0.0
    %874 = vmatprep.subr.mxu0 0.0
    %875 = vmatpush1.msra.mxu0 0.0
    %876 = vmatprep.subr.mxu0 0.0
    %877 = vmatpush1.msra.mxu0 0.0
    %878 = vmatprep.subr.mxu0 0.0
    %879 = vmatpush1.msra.mxu0 0.0
    %880 = vmatprep.subr.mxu0 0.0
    %881 = vmatpush1.msra.mxu0 0.0
    %882 = vmatprep.subr.mxu0 0.0
    %883 = vmatpush1.msra.mxu0 0.0
    %884 = vmatprep.subr.mxu0 0.0
    %885 = vmatpush1.msra.mxu0 0.0
    %886 = vmatprep.subr.mxu0 0.0
    %887 = vmatpush1.msra.mxu0 0.0
    %888 = vmatprep.mubr.f32.mxu0 0.0
    %889 = vmatmul.mubr.f32.gmra.mrb[0].mxu0 %v822
    %v890 = vpop.f32.mrb[0].mxu0
    %v891 = vadd.f32 0.0, %v890
    %v892 = vpop.f32.mrb[0].mxu0
    %893 = vdwg.mxu0
    %v894 = vadd.f32 %v810, %v891
    %v895 = vld [vmem:[#allocation2 + $0x6] sm:$0x1]
    %v896 = vld [vmem:[#allocation2 + $0x16] sm:$0x1]
    %s897 = scalar_lea.vmem %s4, 192
    %v898 = vld [vmem:[%s897] sm:$0xff]
    %v899 = vld [vmem:[%s897 + $0x8] sm:$0xff]
    %v900 = vld [vmem:[%s897 + $0x10] sm:$0xff]
    %v901 = vld [vmem:[%s897 + $0x18] sm:$0xff]
    %v904 = vrot.slane %v896, 7
    %v905 = vsel %vm409, %v904, %v895
    %v906 = vsel %vm220, %v905, 0
    %908 = vmatprep.subr.mxu0 0.0
    %909 = vmatpush1.msra.mxu0 %v898
    %910 = vmatprep.subr.mxu0 0.0
    %911 = vmatpush1.msra.mxu0 %v899
    %912 = vmatprep.subr.mxu0 0.0
    %913 = vmatpush1.msra.mxu0 %v900
    %914 = vmatprep.subr.mxu0 0.0
    %915 = vmatpush1.msra.mxu0 %v901
    %916 = vmatprep.subr.mxu0 0.0
    %917 = vmatpush1.msra.mxu0 0.0
    %918 = vmatprep.subr.mxu0 0.0
    %919 = vmatpush1.msra.mxu0 0.0
    %920 = vmatprep.subr.mxu0 0.0
    %921 = vmatpush1.msra.mxu0 0.0
    %922 = vmatprep.subr.mxu0 0.0
    %923 = vmatpush1.msra.mxu0 0.0
    %924 = vmatprep.subr.mxu0 0.0
    %925 = vmatpush1.msra.mxu0 0.0
    %926 = vmatprep.subr.mxu0 0.0
    %927 = vmatpush1.msra.mxu0 0.0
    %928 = vmatprep.subr.mxu0 0.0
    %929 = vmatpush1.msra.mxu0 0.0
    %930 = vmatprep.subr.mxu0 0.0
    %931 = vmatpush1.msra.mxu0 0.0
    %932 = vmatprep.subr.mxu0 0.0
    %933 = vmatpush1.msra.mxu0 0.0
    %934 = vmatprep.subr.mxu0 0.0
    %935 = vmatpush1.msra.mxu0 0.0
    %936 = vmatprep.subr.mxu0 0.0
    %937 = vmatpush1.msra.mxu0 0.0
    %938 = vmatprep.subr.mxu0 0.0
    %939 = vmatpush1.msra.mxu0 0.0
    %940 = vmatprep.subr.mxu0 0.0
    %941 = vmatpush1.msra.mxu0 0.0
    %942 = vmatprep.subr.mxu0 0.0
    %943 = vmatpush1.msra.mxu0 0.0
    %944 = vmatprep.subr.mxu0 0.0
    %945 = vmatpush1.msra.mxu0 0.0
    %946 = vmatprep.subr.mxu0 0.0
    %947 = vmatpush1.msra.mxu0 0.0
    %948 = vmatprep.subr.mxu0 0.0
    %949 = vmatpush1.msra.mxu0 0.0
    %950 = vmatprep.subr.mxu0 0.0
    %951 = vmatpush1.msra.mxu0 0.0
    %952 = vmatprep.subr.mxu0 0.0
    %953 = vmatpush1.msra.mxu0 0.0
    %954 = vmatprep.subr.mxu0 0.0
    %955 = vmatpush1.msra.mxu0 0.0
    %956 = vmatprep.subr.mxu0 0.0
    %957 = vmatpush1.msra.mxu0 0.0
    %958 = vmatprep.subr.mxu0 0.0
    %959 = vmatpush1.msra.mxu0 0.0
    %960 = vmatprep.subr.mxu0 0.0
    %961 = vmatpush1.msra.mxu0 0.0
    %962 = vmatprep.subr.mxu0 0.0
    %963 = vmatpush1.msra.mxu0 0.0
    %964 = vmatprep.subr.mxu0 0.0
    %965 = vmatpush1.msra.mxu0 0.0
    %966 = vmatprep.subr.mxu0 0.0
    %967 = vmatpush1.msra.mxu0 0.0
    %968 = vmatprep.subr.mxu0 0.0
    %969 = vmatpush1.msra.mxu0 0.0
    %970 = vmatprep.subr.mxu0 0.0
    %971 = vmatpush1.msra.mxu0 0.0
    %972 = vmatprep.mubr.f32.mxu0 0.0
    %973 = vmatmul.mubr.f32.gmra.mrb[0].mxu0 %v906
    %v974 = vpop.f32.mrb[0].mxu0
    %v975 = vadd.f32 0.0, %v974
    %v976 = vpop.f32.mrb[0].mxu0
    %977 = vdwg.mxu0
    %v978 = vadd.f32 %v894, %v975
    %v979 = vld [vmem:[#allocation2 + $0x7] sm:$0x1]
    %v980 = vld [vmem:[#allocation2 + $0x17] sm:$0x1]
    %s981 = scalar_lea.vmem %s4, 224
    %v982 = vld [vmem:[%s981] sm:$0xff]
    %v983 = vld [vmem:[%s981 + $0x8] sm:$0xff]
    %v984 = vld [vmem:[%s981 + $0x10] sm:$0xff]
    %v985 = vld [vmem:[%s981 + $0x18] sm:$0xff]
    %v988 = vrot.slane %v980, 7
    %v989 = vsel %vm409, %v988, %v979
    %v990 = vsel %vm220, %v989, 0
    %992 = vmatprep.subr.mxu0 0.0
    %993 = vmatpush1.msra.mxu0 %v982
    %994 = vmatprep.subr.mxu0 0.0
    %995 = vmatpush1.msra.mxu0 %v983
    %996 = vmatprep.subr.mxu0 0.0
    %997 = vmatpush1.msra.mxu0 %v984
    %998 = vmatprep.subr.mxu0 0.0
    %999 = vmatpush1.msra.mxu0 %v985
    %1000 = vmatprep.subr.mxu0 0.0
    %1001 = vmatpush1.msra.mxu0 0.0
    %1002 = vmatprep.subr.mxu0 0.0
    %1003 = vmatpush1.msra.mxu0 0.0
    %1004 = vmatprep.subr.mxu0 0.0
    %1005 = vmatpush1.msra.mxu0 0.0
    %1006 = vmatprep.subr.mxu0 0.0
    %1007 = vmatpush1.msra.mxu0 0.0
    %1008 = vmatprep.subr.mxu0 0.0
    %1009 = vmatpush1.msra.mxu0 0.0
    %1010 = vmatprep.subr.mxu0 0.0
    %1011 = vmatpush1.msra.mxu0 0.0
    %1012 = vmatprep.subr.mxu0 0.0
    %1013 = vmatpush1.msra.mxu0 0.0
    %1014 = vmatprep.subr.mxu0 0.0
    %1015 = vmatpush1.msra.mxu0 0.0
    %1016 = vmatprep.subr.mxu0 0.0
    %1017 = vmatpush1.msra.mxu0 0.0
    %1018 = vmatprep.subr.mxu0 0.0
    %1019 = vmatpush1.msra.mxu0 0.0
    %1020 = vmatprep.subr.mxu0 0.0
    %1021 = vmatpush1.msra.mxu0 0.0
    %1022 = vmatprep.subr.mxu0 0.0
    %1023 = vmatpush1.msra.mxu0 0.0
    %1024 = vmatprep.subr.mxu0 0.0
    %1025 = vmatpush1.msra.mxu0 0.0
    %1026 = vmatprep.subr.mxu0 0.0
    %1027 = vmatpush1.msra.mxu0 0.0
    %1028 = vmatprep.subr.mxu0 0.0
    %1029 = vmatpush1.msra.mxu0 0.0
    %1030 = vmatprep.subr.mxu0 0.0
    %1031 = vmatpush1.msra.mxu0 0.0
    %1032 = vmatprep.subr.mxu0 0.0
    %1033 = vmatpush1.msra.mxu0 0.0
    %1034 = vmatprep.subr.mxu0 0.0
    %1035 = vmatpush1.msra.mxu0 0.0
    %1036 = vmatprep.subr.mxu0 0.0
    %1037 = vmatpush1.msra.mxu0 0.0
    %1038 = vmatprep.subr.mxu0 0.0
    %1039 = vmatpush1.msra.mxu0 0.0
    %1040 = vmatprep.subr.mxu0 0.0
    %1041 = vmatpush1.msra.mxu0 0.0
    %1042 = vmatprep.subr.mxu0 0.0
    %1043 = vmatpush1.msra.mxu0 0.0
    %1044 = vmatprep.subr.mxu0 0.0
    %1045 = vmatpush1.msra.mxu0 0.0
    %1046 = vmatprep.subr.mxu0 0.0
    %1047 = vmatpush1.msra.mxu0 0.0
    %1048 = vmatprep.subr.mxu0 0.0
    %1049 = vmatpush1.msra.mxu0 0.0
    %1050 = vmatprep.subr.mxu0 0.0
    %1051 = vmatpush1.msra.mxu0 0.0
    %1052 = vmatprep.subr.mxu0 0.0
    %1053 = vmatpush1.msra.mxu0 0.0
    %1054 = vmatprep.subr.mxu0 0.0
    %1055 = vmatpush1.msra.mxu0 0.0
    %1056 = vmatprep.mubr.f32.mxu0 0.0
    %1057 = vmatmul.mubr.f32.gmra.mrb[0].mxu0 %v990
    %v1058 = vpop.f32.mrb[0].mxu0
    %v1059 = vadd.f32 0.0, %v1058
    %v1060 = vpop.f32.mrb[0].mxu0
    %1061 = vdwg.mxu0
    %v1062 = vadd.f32 %v978, %v1059
    %v1063 = vld [vmem:[#allocation2 + $0x8] sm:$0x1]
    %v1064 = vld [vmem:[#allocation2 + $0x18] sm:$0x1]
    %s1065 = scalar_lea.vmem %s4, 256
    %v1066 = vld [vmem:[%s1065] sm:$0xff]
    %v1067 = vld [vmem:[%s1065 + $0x8] sm:$0xff]
    %v1068 = vld [vmem:[%s1065 + $0x10] sm:$0xff]
    %v1069 = vld [vmem:[%s1065 + $0x18] sm:$0xff]
    %v1072 = vrot.slane %v1064, 7
    %v1073 = vsel %vm409, %v1072, %v1063
    %v1074 = vsel %vm220, %v1073, 0
    %1076 = vmatprep.subr.mxu0 0.0
    %1077 = vmatpush1.msra.mxu0 %v1066
    %1078 = vmatprep.subr.mxu0 0.0
    %1079 = vmatpush1.msra.mxu0 %v1067
    %1080 = vmatprep.subr.mxu0 0.0
    %1081 = vmatpush1.msra.mxu0 %v1068
    %1082 = vmatprep.subr.mxu0 0.0
    %1083 = vmatpush1.msra.mxu0 %v1069
    %1084 = vmatprep.subr.mxu0 0.0
    %1085 = vmatpush1.msra.mxu0 0.0
    %1086 = vmatprep.subr.mxu0 0.0
    %1087 = vmatpush1.msra.mxu0 0.0
    %1088 = vmatprep.subr.mxu0 0.0
    %1089 = vmatpush1.msra.mxu0 0.0
    %1090 = vmatprep.subr.mxu0 0.0
    %1091 = vmatpush1.msra.mxu0 0.0
    %1092 = vmatprep.subr.mxu0 0.0
    %1093 = vmatpush1.msra.mxu0 0.0
    %1094 = vmatprep.subr.mxu0 0.0
    %1095 = vmatpush1.msra.mxu0 0.0
    %1096 = vmatprep.subr.mxu0 0.0
    %1097 = vmatpush1.msra.mxu0 0.0
    %1098 = vmatprep.subr.mxu0 0.0
    %1099 = vmatpush1.msra.mxu0 0.0
    %1100 = vmatprep.subr.mxu0 0.0
    %1101 = vmatpush1.msra.mxu0 0.0
    %1102 = vmatprep.subr.mxu0 0.0
    %1103 = vmatpush1.msra.mxu0 0.0
    %1104 = vmatprep.subr.mxu0 0.0
    %1105 = vmatpush1.msra.mxu0 0.0
    %1106 = vmatprep.subr.mxu0 0.0
    %1107 = vmatpush1.msra.mxu0 0.0
    %1108 = vmatprep.subr.mxu0 0.0
    %1109 = vmatpush1.msra.mxu0 0.0
    %1110 = vmatprep.subr.mxu0 0.0
    %1111 = vmatpush1.msra.mxu0 0.0
    %1112 = vmatprep.subr.mxu0 0.0
    %1113 = vmatpush1.msra.mxu0 0.0
    %1114 = vmatprep.subr.mxu0 0.0
    %1115 = vmatpush1.msra.mxu0 0.0
    %1116 = vmatprep.subr.mxu0 0.0
    %1117 = vmatpush1.msra.mxu0 0.0
    %1118 = vmatprep.subr.mxu0 0.0
    %1119 = vmatpush1.msra.mxu0 0.0
    %1120 = vmatprep.subr.mxu0 0.0
    %1121 = vmatpush1.msra.mxu0 0.0
    %1122 = vmatprep.subr.mxu0 0.0
    %1123 = vmatpush1.msra.mxu0 0.0
    %1124 = vmatprep.subr.mxu0 0.0
    %1125 = vmatpush1.msra.mxu0 0.0
    %1126 = vmatprep.subr.mxu0 0.0
    %1127 = vmatpush1.msra.mxu0 0.0
    %1128 = vmatprep.subr.mxu0 0.0
    %1129 = vmatpush1.msra.mxu0 0.0
    %1130 = vmatprep.subr.mxu0 0.0
    %1131 = vmatpush1.msra.mxu0 0.0
    %1132 = vmatprep.subr.mxu0 0.0
    %1133 = vmatpush1.msra.mxu0 0.0
    %1134 = vmatprep.subr.mxu0 0.0
    %1135 = vmatpush1.msra.mxu0 0.0
    %1136 = vmatprep.subr.mxu0 0.0
    %1137 = vmatpush1.msra.mxu0 0.0
    %1138 = vmatprep.subr.mxu0 0.0
    %1139 = vmatpush1.msra.mxu0 0.0
    %1140 = vmatprep.mubr.f32.mxu0 0.0
    %1141 = vmatmul.mubr.f32.gmra.mrb[0].mxu0 %v1074
    %v1142 = vpop.f32.mrb[0].mxu0
    %v1143 = vadd.f32 0.0, %v1142
    %v1144 = vpop.f32.mrb[0].mxu0
    %1145 = vdwg.mxu0
    %v1146 = vadd.f32 %v1062, %v1143
    %v1147 = vld [vmem:[#allocation2 + $0x9] sm:$0x1]
    %v1148 = vld [vmem:[#allocation2 + $0x19] sm:$0x1]
    %s1149 = scalar_lea.vmem %s4, 288
    %v1150 = vld [vmem:[%s1149] sm:$0xff]
    %v1151 = vld [vmem:[%s1149 + $0x8] sm:$0xff]
    %v1152 = vld [vmem:[%s1149 + $0x10] sm:$0xff]
    %v1153 = vld [vmem:[%s1149 + $0x18] sm:$0xff]
    %v1156 = vrot.slane %v1148, 7
    %v1157 = vsel %vm409, %v1156, %v1147
    %v1158 = vsel %vm220, %v1157, 0
    %1160 = vmatprep.subr.mxu0 0.0
    %1161 = vmatpush1.msra.mxu0 %v1150
    %1162 = vmatprep.subr.mxu0 0.0
    %1163 = vmatpush1.msra.mxu0 %v1151
    %1164 = vmatprep.subr.mxu0 0.0
    %1165 = vmatpush1.msra.mxu0 %v1152
    %1166 = vmatprep.subr.mxu0 0.0
    %1167 = vmatpush1.msra.mxu0 %v1153
    %1168 = vmatprep.subr.mxu0 0.0
    %1169 = vmatpush1.msra.mxu0 0.0
    %1170 = vmatprep.subr.mxu0 0.0
    %1171 = vmatpush1.msra.mxu0 0.0
    %1172 = vmatprep.subr.mxu0 0.0
    %1173 = vmatpush1.msra.mxu0 0.0
    %1174 = vmatprep.subr.mxu0 0.0
    %1175 = vmatpush1.msra.mxu0 0.0
    %1176 = vmatprep.subr.mxu0 0.0
    %1177 = vmatpush1.msra.mxu0 0.0
    %1178 = vmatprep.subr.mxu0 0.0
    %1179 = vmatpush1.msra.mxu0 0.0
    %1180 = vmatprep.subr.mxu0 0.0
    %1181 = vmatpush1.msra.mxu0 0.0
    %1182 = vmatprep.subr.mxu0 0.0
    %1183 = vmatpush1.msra.mxu0 0.0
    %1184 = vmatprep.subr.mxu0 0.0
    %1185 = vmatpush1.msra.mxu0 0.0
    %1186 = vmatprep.subr.mxu0 0.0
    %1187 = vmatpush1.msra.mxu0 0.0
    %1188 = vmatprep.subr.mxu0 0.0
    %1189 = vmatpush1.msra.mxu0 0.0
    %1190 = vmatprep.subr.mxu0 0.0
    %1191 = vmatpush1.msra.mxu0 0.0
    %1192 = vmatprep.subr.mxu0 0.0
    %1193 = vmatpush1.msra.mxu0 0.0
    %1194 = vmatprep.subr.mxu0 0.0
    %1195 = vmatpush1.msra.mxu0 0.0
    %1196 = vmatprep.subr.mxu0 0.0
    %1197 = vmatpush1.msra.mxu0 0.0
    %1198 = vmatprep.subr.mxu0 0.0
    %1199 = vmatpush1.msra.mxu0 0.0
    %1200 = vmatprep.subr.mxu0 0.0
    %1201 = vmatpush1.msra.mxu0 0.0
    %1202 = vmatprep.subr.mxu0 0.0
    %1203 = vmatpush1.msra.mxu0 0.0
    %1204 = vmatprep.subr.mxu0 0.0
    %1205 = vmatpush1.msra.mxu0 0.0
    %1206 = vmatprep.subr.mxu0 0.0
    %1207 = vmatpush1.msra.mxu0 0.0
    %1208 = vmatprep.subr.mxu0 0.0
    %1209 = vmatpush1.msra.mxu0 0.0
    %1210 = vmatprep.subr.mxu0 0.0
    %1211 = vmatpush1.msra.mxu0 0.0
    %1212 = vmatprep.subr.mxu0 0.0
    %1213 = vmatpush1.msra.mxu0 0.0
    %1214 = vmatprep.subr.mxu0 0.0
    %1215 = vmatpush1.msra.mxu0 0.0
    %1216 = vmatprep.subr.mxu0 0.0
    %1217 = vmatpush1.msra.mxu0 0.0
    %1218 = vmatprep.subr.mxu0 0.0
    %1219 = vmatpush1.msra.mxu0 0.0
    %1220 = vmatprep.subr.mxu0 0.0
    %1221 = vmatpush1.msra.mxu0 0.0
    %1222 = vmatprep.subr.mxu0 0.0
    %1223 = vmatpush1.msra.mxu0 0.0
    %1224 = vmatprep.mubr.f32.mxu0 0.0
    %1225 = vmatmul.mubr.f32.gmra.mrb[0].mxu0 %v1158
    %v1226 = vpop.f32.mrb[0].mxu0
    %v1227 = vadd.f32 0.0, %v1226
    %v1228 = vpop.f32.mrb[0].mxu0
    %1229 = vdwg.mxu0
    %v1230 = vadd.f32 %v1146, %v1227
    %v1231 = vld [vmem:[#allocation2 + $0xa] sm:$0x1]
    %v1232 = vld [vmem:[#allocation2 + $0x1a] sm:$0x1]
    %s1233 = scalar_lea.vmem %s4, 320
    %v1234 = vld [vmem:[%s1233] sm:$0xff]
    %v1235 = vld [vmem:[%s1233 + $0x8] sm:$0xff]
    %v1236 = vld [vmem:[%s1233 + $0x10] sm:$0xff]
    %v1237 = vld [vmem:[%s1233 + $0x18] sm:$0xff]
    %v1240 = vrot.slane %v1232, 7
    %v1241 = vsel %vm409, %v1240, %v1231
    %v1242 = vsel %vm220, %v1241, 0
    %1244 = vmatprep.subr.mxu0 0.0
    %1245 = vmatpush1.msra.mxu0 %v1234
    %1246 = vmatprep.subr.mxu0 0.0
    %1247 = vmatpush1.msra.mxu0 %v1235
    %1248 = vmatprep.subr.mxu0 0.0
    %1249 = vmatpush1.msra.mxu0 %v1236
    %1250 = vmatprep.subr.mxu0 0.0
    %1251 = vmatpush1.msra.mxu0 %v1237
    %1252 = vmatprep.subr.mxu0 0.0
    %1253 = vmatpush1.msra.mxu0 0.0
    %1254 = vmatprep.subr.mxu0 0.0
    %1255 = vmatpush1.msra.mxu0 0.0
    %1256 = vmatprep.subr.mxu0 0.0
    %1257 = vmatpush1.msra.mxu0 0.0
    %1258 = vmatprep.subr.mxu0 0.0
    %1259 = vmatpush1.msra.mxu0 0.0
    %1260 = vmatprep.subr.mxu0 0.0
    %1261 = vmatpush1.msra.mxu0 0.0
    %1262 = vmatprep.subr.mxu0 0.0
    %1263 = vmatpush1.msra.mxu0 0.0
    %1264 = vmatprep.subr.mxu0 0.0
    %1265 = vmatpush1.msra.mxu0 0.0
    %1266 = vmatprep.subr.mxu0 0.0
    %1267 = vmatpush1.msra.mxu0 0.0
    %1268 = vmatprep.subr.mxu0 0.0
    %1269 = vmatpush1.msra.mxu0 0.0
    %1270 = vmatprep.subr.mxu0 0.0
    %1271 = vmatpush1.msra.mxu0 0.0
    %1272 = vmatprep.subr.mxu0 0.0
    %1273 = vmatpush1.msra.mxu0 0.0
    %1274 = vmatprep.subr.mxu0 0.0
    %1275 = vmatpush1.msra.mxu0 0.0
    %1276 = vmatprep.subr.mxu0 0.0
    %1277 = vmatpush1.msra.mxu0 0.0
    %1278 = vmatprep.subr.mxu0 0.0
    %1279 = vmatpush1.msra.mxu0 0.0
    %1280 = vmatprep.subr.mxu0 0.0
    %1281 = vmatpush1.msra.mxu0 0.0
    %1282 = vmatprep.subr.mxu0 0.0
    %1283 = vmatpush1.msra.mxu0 0.0
    %1284 = vmatprep.subr.mxu0 0.0
    %1285 = vmatpush1.msra.mxu0 0.0
    %1286 = vmatprep.subr.mxu0 0.0
    %1287 = vmatpush1.msra.mxu0 0.0
    %1288 = vmatprep.subr.mxu0 0.0
    %1289 = vmatpush1.msra.mxu0 0.0
    %1290 = vmatprep.subr.mxu0 0.0
    %1291 = vmatpush1.msra.mxu0 0.0
    %1292 = vmatprep.subr.mxu0 0.0
    %1293 = vmatpush1.msra.mxu0 0.0
    %1294 = vmatprep.subr.mxu0 0.0
    %1295 = vmatpush1.msra.mxu0 0.0
    %1296 = vmatprep.subr.mxu0 0.0
    %1297 = vmatpush1.msra.mxu0 0.0
    %1298 = vmatprep.subr.mxu0 0.0
    %1299 = vmatpush1.msra.mxu0 0.0
    %1300 = vmatprep.subr.mxu0 0.0
    %1301 = vmatpush1.msra.mxu0 0.0
    %1302 = vmatprep.subr.mxu0 0.0
    %1303 = vmatpush1.msra.mxu0 0.0
    %1304 = vmatprep.subr.mxu0 0.0
    %1305 = vmatpush1.msra.mxu0 0.0
    %1306 = vmatprep.subr.mxu0 0.0
    %1307 = vmatpush1.msra.mxu0 0.0
    %1308 = vmatprep.mubr.f32.mxu0 0.0
    %1309 = vmatmul.mubr.f32.gmra.mrb[0].mxu0 %v1242
    %v1310 = vpop.f32.mrb[0].mxu0
    %v1311 = vadd.f32 0.0, %v1310
    %v1312 = vpop.f32.mrb[0].mxu0
    %1313 = vdwg.mxu0
    %v1314 = vadd.f32 %v1230, %v1311
    %v1315 = vld [vmem:[#allocation2 + $0xb] sm:$0x1]
    %v1316 = vld [vmem:[#allocation2 + $0x1b] sm:$0x1]
    %s1317 = scalar_lea.vmem %s4, 352
    %v1318 = vld [vmem:[%s1317] sm:$0xff]
    %v1319 = vld [vmem:[%s1317 + $0x8] sm:$0xff]
    %v1320 = vld [vmem:[%s1317 + $0x10] sm:$0xff]
    %v1321 = vld [vmem:[%s1317 + $0x18] sm:$0xff]
    %v1324 = vrot.slane %v1316, 7
    %v1325 = vsel %vm409, %v1324, %v1315
    %v1326 = vsel %vm220, %v1325, 0
    %1328 = vmatprep.subr.mxu0 0.0
    %1329 = vmatpush1.msra.mxu0 %v1318
    %1330 = vmatprep.subr.mxu0 0.0
    %1331 = vmatpush1.msra.mxu0 %v1319
    %1332 = vmatprep.subr.mxu0 0.0
    %1333 = vmatpush1.msra.mxu0 %v1320
    %1334 = vmatprep.subr.mxu0 0.0
    %1335 = vmatpush1.msra.mxu0 %v1321
    %1336 = vmatprep.subr.mxu0 0.0
    %1337 = vmatpush1.msra.mxu0 0.0
    %1338 = vmatprep.subr.mxu0 0.0
    %1339 = vmatpush1.msra.mxu0 0.0
    %1340 = vmatprep.subr.mxu0 0.0
    %1341 = vmatpush1.msra.mxu0 0.0
    %1342 = vmatprep.subr.mxu0 0.0
    %1343 = vmatpush1.msra.mxu0 0.0
    %1344 = vmatprep.subr.mxu0 0.0
    %1345 = vmatpush1.msra.mxu0 0.0
    %1346 = vmatprep.subr.mxu0 0.0
    %1347 = vmatpush1.msra.mxu0 0.0
    %1348 = vmatprep.subr.mxu0 0.0
    %1349 = vmatpush1.msra.mxu0 0.0
    %1350 = vmatprep.subr.mxu0 0.0
    %1351 = vmatpush1.msra.mxu0 0.0
    %1352 = vmatprep.subr.mxu0 0.0
    %1353 = vmatpush1.msra.mxu0 0.0
    %1354 = vmatprep.subr.mxu0 0.0
    %1355 = vmatpush1.msra.mxu0 0.0
    %1356 = vmatprep.subr.mxu0 0.0
    %1357 = vmatpush1.msra.mxu0 0.0
    %1358 = vmatprep.subr.mxu0 0.0
    %1359 = vmatpush1.msra.mxu0 0.0
    %1360 = vmatprep.subr.mxu0 0.0
    %1361 = vmatpush1.msra.mxu0 0.0
    %1362 = vmatprep.subr.mxu0 0.0
    %1363 = vmatpush1.msra.mxu0 0.0
    %1364 = vmatprep.subr.mxu0 0.0
    %1365 = vmatpush1.msra.mxu0 0.0
    %1366 = vmatprep.subr.mxu0 0.0
    %1367 = vmatpush1.msra.mxu0 0.0
    %1368 = vmatprep.subr.mxu0 0.0
    %1369 = vmatpush1.msra.mxu0 0.0
    %1370 = vmatprep.subr.mxu0 0.0
    %1371 = vmatpush1.msra.mxu0 0.0
    %1372 = vmatprep.subr.mxu0 0.0
    %1373 = vmatpush1.msra.mxu0 0.0
    %1374 = vmatprep.subr.mxu0 0.0
    %1375 = vmatpush1.msra.mxu0 0.0
    %1376 = vmatprep.subr.mxu0 0.0
    %1377 = vmatpush1.msra.mxu0 0.0
    %1378 = vmatprep.subr.mxu0 0.0
    %1379 = vmatpush1.msra.mxu0 0.0
    %1380 = vmatprep.subr.mxu0 0.0
    %1381 = vmatpush1.msra.mxu0 0.0
    %1382 = vmatprep.subr.mxu0 0.0
    %1383 = vmatpush1.msra.mxu0 0.0
    %1384 = vmatprep.subr.mxu0 0.0
    %1385 = vmatpush1.msra.mxu0 0.0
    %1386 = vmatprep.subr.mxu0 0.0
    %1387 = vmatpush1.msra.mxu0 0.0
    %1388 = vmatprep.subr.mxu0 0.0
    %1389 = vmatpush1.msra.mxu0 0.0
    %1390 = vmatprep.subr.mxu0 0.0
    %1391 = vmatpush1.msra.mxu0 0.0
    %1392 = vmatprep.mubr.f32.mxu0 0.0
    %1393 = vmatmul.mubr.f32.gmra.mrb[0].mxu0 %v1326
    %v1394 = vpop.f32.mrb[0].mxu0
    %v1395 = vadd.f32 0.0, %v1394
    %v1396 = vpop.f32.mrb[0].mxu0
    %1397 = vdwg.mxu0
    %v1398 = vadd.f32 %v1314, %v1395
    %v1399 = vld [vmem:[#allocation2 + $0xc] sm:$0x1]
    %v1400 = vld [vmem:[#allocation2 + $0x1c] sm:$0x1]
    %s1401 = scalar_lea.vmem %s4, 384
    %v1402 = vld [vmem:[%s1401] sm:$0xff]
    %v1403 = vld [vmem:[%s1401 + $0x8] sm:$0xff]
    %v1404 = vld [vmem:[%s1401 + $0x10] sm:$0xff]
    %v1405 = vld [vmem:[%s1401 + $0x18] sm:$0xff]
    %v1408 = vrot.slane %v1400, 7
    %v1409 = vsel %vm409, %v1408, %v1399
    %v1410 = vsel %vm220, %v1409, 0
    %1412 = vmatprep.subr.mxu0 0.0
    %1413 = vmatpush1.msra.mxu0 %v1402
    %1414 = vmatprep.subr.mxu0 0.0
    %1415 = vmatpush1.msra.mxu0 %v1403
    %1416 = vmatprep.subr.mxu0 0.0
    %1417 = vmatpush1.msra.mxu0 %v1404
    %1418 = vmatprep.subr.mxu0 0.0
    %1419 = vmatpush1.msra.mxu0 %v1405
    %1420 = vmatprep.subr.mxu0 0.0
    %1421 = vmatpush1.msra.mxu0 0.0
    %1422 = vmatprep.subr.mxu0 0.0
    %1423 = vmatpush1.msra.mxu0 0.0
    %1424 = vmatprep.subr.mxu0 0.0
    %1425 = vmatpush1.msra.mxu0 0.0
    %1426 = vmatprep.subr.mxu0 0.0
    %1427 = vmatpush1.msra.mxu0 0.0
    %1428 = vmatprep.subr.mxu0 0.0
    %1429 = vmatpush1.msra.mxu0 0.0
    %1430 = vmatprep.subr.mxu0 0.0
    %1431 = vmatpush1.msra.mxu0 0.0
    %1432 = vmatprep.subr.mxu0 0.0
    %1433 = vmatpush1.msra.mxu0 0.0
    %1434 = vmatprep.subr.mxu0 0.0
    %1435 = vmatpush1.msra.mxu0 0.0
    %1436 = vmatprep.subr.mxu0 0.0
    %1437 = vmatpush1.msra.mxu0 0.0
    %1438 = vmatprep.subr.mxu0 0.0
    %1439 = vmatpush1.msra.mxu0 0.0
    %1440 = vmatprep.subr.mxu0 0.0
    %1441 = vmatpush1.msra.mxu0 0.0
    %1442 = vmatprep.subr.mxu0 0.0
    %1443 = vmatpush1.msra.mxu0 0.0
    %1444 = vmatprep.subr.mxu0 0.0
    %1445 = vmatpush1.msra.mxu0 0.0
    %1446 = vmatprep.subr.mxu0 0.0
    %1447 = vmatpush1.msra.mxu0 0.0
    %1448 = vmatprep.subr.mxu0 0.0
    %1449 = vmatpush1.msra.mxu0 0.0
    %1450 = vmatprep.subr.mxu0 0.0
    %1451 = vmatpush1.msra.mxu0 0.0
    %1452 = vmatprep.subr.mxu0 0.0
    %1453 = vmatpush1.msra.mxu0 0.0
    %1454 = vmatprep.subr.mxu0 0.0
    %1455 = vmatpush1.msra.mxu0 0.0
    %1456 = vmatprep.subr.mxu0 0.0
    %1457 = vmatpush1.msra.mxu0 0.0
    %1458 = vmatprep.subr.mxu0 0.0
    %1459 = vmatpush1.msra.mxu0 0.0
    %1460 = vmatprep.subr.mxu0 0.0
    %1461 = vmatpush1.msra.mxu0 0.0
    %1462 = vmatprep.subr.mxu0 0.0
    %1463 = vmatpush1.msra.mxu0 0.0
    %1464 = vmatprep.subr.mxu0 0.0
    %1465 = vmatpush1.msra.mxu0 0.0
    %1466 = vmatprep.subr.mxu0 0.0
    %1467 = vmatpush1.msra.mxu0 0.0
    %1468 = vmatprep.subr.mxu0 0.0
    %1469 = vmatpush1.msra.mxu0 0.0
    %1470 = vmatprep.subr.mxu0 0.0
    %1471 = vmatpush1.msra.mxu0 0.0
    %1472 = vmatprep.subr.mxu0 0.0
    %1473 = vmatpush1.msra.mxu0 0.0
    %1474 = vmatprep.subr.mxu0 0.0
    %1475 = vmatpush1.msra.mxu0 0.0
    %1476 = vmatprep.mubr.f32.mxu0 0.0
    %1477 = vmatmul.mubr.f32.gmra.mrb[0].mxu0 %v1410
    %v1478 = vpop.f32.mrb[0].mxu0
    %v1479 = vadd.f32 0.0, %v1478
    %v1480 = vpop.f32.mrb[0].mxu0
    %1481 = vdwg.mxu0
    %v1482 = vadd.f32 %v1398, %v1479
    %v1483 = vld [vmem:[#allocation2 + $0xd] sm:$0x1]
    %v1484 = vld [vmem:[#allocation2 + $0x1d] sm:$0x1]
    %s1485 = scalar_lea.vmem %s4, 416
    %v1486 = vld [vmem:[%s1485] sm:$0xff]
    %v1487 = vld [vmem:[%s1485 + $0x8] sm:$0xff]
    %v1488 = vld [vmem:[%s1485 + $0x10] sm:$0xff]
    %v1489 = vld [vmem:[%s1485 + $0x18] sm:$0xff]
    %v1492 = vrot.slane %v1484, 7
    %v1493 = vsel %vm409, %v1492, %v1483
    %v1494 = vsel %vm220, %v1493, 0
    %1496 = vmatprep.subr.mxu0 0.0
    %1497 = vmatpush1.msra.mxu0 %v1486
    %1498 = vmatprep.subr.mxu0 0.0
    %1499 = vmatpush1.msra.mxu0 %v1487
    %1500 = vmatprep.subr.mxu0 0.0
    %1501 = vmatpush1.msra.mxu0 %v1488
    %1502 = vmatprep.subr.mxu0 0.0
    %1503 = vmatpush1.msra.mxu0 %v1489
    %1504 = vmatprep.subr.mxu0 0.0
    %1505 = vmatpush1.msra.mxu0 0.0
    %1506 = vmatprep.subr.mxu0 0.0
    %1507 = vmatpush1.msra.mxu0 0.0
    %1508 = vmatprep.subr.mxu0 0.0
    %1509 = vmatpush1.msra.mxu0 0.0
    %1510 = vmatprep.subr.mxu0 0.0
    %1511 = vmatpush1.msra.mxu0 0.0
    %1512 = vmatprep.subr.mxu0 0.0
    %1513 = vmatpush1.msra.mxu0 0.0
    %1514 = vmatprep.subr.mxu0 0.0
    %1515 = vmatpush1.msra.mxu0 0.0
    %1516 = vmatprep.subr.mxu0 0.0
    %1517 = vmatpush1.msra.mxu0 0.0
    %1518 = vmatprep.subr.mxu0 0.0
    %1519 = vmatpush1.msra.mxu0 0.0
    %1520 = vmatprep.subr.mxu0 0.0
    %1521 = vmatpush1.msra.mxu0 0.0
    %1522 = vmatprep.subr.mxu0 0.0
    %1523 = vmatpush1.msra.mxu0 0.0
    %1524 = vmatprep.subr.mxu0 0.0
    %1525 = vmatpush1.msra.mxu0 0.0
    %1526 = vmatprep.subr.mxu0 0.0
    %1527 = vmatpush1.msra.mxu0 0.0
    %1528 = vmatprep.subr.mxu0 0.0
    %1529 = vmatpush1.msra.mxu0 0.0
    %1530 = vmatprep.subr.mxu0 0.0
    %1531 = vmatpush1.msra.mxu0 0.0
    %1532 = vmatprep.subr.mxu0 0.0
    %1533 = vmatpush1.msra.mxu0 0.0
    %1534 = vmatprep.subr.mxu0 0.0
    %1535 = vmatpush1.msra.mxu0 0.0
    %1536 = vmatprep.subr.mxu0 0.0
    %1537 = vmatpush1.msra.mxu0 0.0
    %1538 = vmatprep.subr.mxu0 0.0
    %1539 = vmatpush1.msra.mxu0 0.0
    %1540 = vmatprep.subr.mxu0 0.0
    %1541 = vmatpush1.msra.mxu0 0.0
    %1542 = vmatprep.subr.mxu0 0.0
    %1543 = vmatpush1.msra.mxu0 0.0
    %1544 = vmatprep.subr.mxu0 0.0
    %1545 = vmatpush1.msra.mxu0 0.0
    %1546 = vmatprep.subr.mxu0 0.0
    %1547 = vmatpush1.msra.mxu0 0.0
    %1548 = vmatprep.subr.mxu0 0.0
    %1549 = vmatpush1.msra.mxu0 0.0
    %1550 = vmatprep.subr.mxu0 0.0
    %1551 = vmatpush1.msra.mxu0 0.0
    %1552 = vmatprep.subr.mxu0 0.0
    %1553 = vmatpush1.msra.mxu0 0.0
    %1554 = vmatprep.subr.mxu0 0.0
    %1555 = vmatpush1.msra.mxu0 0.0
    %1556 = vmatprep.subr.mxu0 0.0
    %1557 = vmatpush1.msra.mxu0 0.0
    %1558 = vmatprep.subr.mxu0 0.0
    %1559 = vmatpush1.msra.mxu0 0.0
    %1560 = vmatprep.mubr.f32.mxu0 0.0
    %1561 = vmatmul.mubr.f32.gmra.mrb[0].mxu0 %v1494
    %v1562 = vpop.f32.mrb[0].mxu0
    %v1563 = vadd.f32 0.0, %v1562
    %v1564 = vpop.f32.mrb[0].mxu0
    %1565 = vdwg.mxu0
    %v1566 = vadd.f32 %v1482, %v1563
    %v1567 = vld [vmem:[#allocation2 + $0xe] sm:$0x1]
    %v1568 = vld [vmem:[#allocation2 + $0x1e] sm:$0x1]
    %s1569 = scalar_lea.vmem %s4, 448
    %v1570 = vld [vmem:[%s1569] sm:$0xff]
    %v1571 = vld [vmem:[%s1569 + $0x8] sm:$0xff]
    %v1572 = vld [vmem:[%s1569 + $0x10] sm:$0xff]
    %v1573 = vld [vmem:[%s1569 + $0x18] sm:$0xff]
    %v1576 = vrot.slane %v1568, 7
    %v1577 = vsel %vm409, %v1576, %v1567
    %v1578 = vsel %vm220, %v1577, 0
    %1580 = vmatprep.subr.mxu0 0.0
    %1581 = vmatpush1.msra.mxu0 %v1570
    %1582 = vmatprep.subr.mxu0 0.0
    %1583 = vmatpush1.msra.mxu0 %v1571
    %1584 = vmatprep.subr.mxu0 0.0
    %1585 = vmatpush1.msra.mxu0 %v1572
    %1586 = vmatprep.subr.mxu0 0.0
    %1587 = vmatpush1.msra.mxu0 %v1573
    %1588 = vmatprep.subr.mxu0 0.0
    %1589 = vmatpush1.msra.mxu0 0.0
    %1590 = vmatprep.subr.mxu0 0.0
    %1591 = vmatpush1.msra.mxu0 0.0
    %1592 = vmatprep.subr.mxu0 0.0
    %1593 = vmatpush1.msra.mxu0 0.0
    %1594 = vmatprep.subr.mxu0 0.0
    %1595 = vmatpush1.msra.mxu0 0.0
    %1596 = vmatprep.subr.mxu0 0.0
    %1597 = vmatpush1.msra.mxu0 0.0
    %1598 = vmatprep.subr.mxu0 0.0
    %1599 = vmatpush1.msra.mxu0 0.0
    %1600 = vmatprep.subr.mxu0 0.0
    %1601 = vmatpush1.msra.mxu0 0.0
    %1602 = vmatprep.subr.mxu0 0.0
    %1603 = vmatpush1.msra.mxu0 0.0
    %1604 = vmatprep.subr.mxu0 0.0
    %1605 = vmatpush1.msra.mxu0 0.0
    %1606 = vmatprep.subr.mxu0 0.0
    %1607 = vmatpush1.msra.mxu0 0.0
    %1608 = vmatprep.subr.mxu0 0.0
    %1609 = vmatpush1.msra.mxu0 0.0
    %1610 = vmatprep.subr.mxu0 0.0
    %1611 = vmatpush1.msra.mxu0 0.0
    %1612 = vmatprep.subr.mxu0 0.0
    %1613 = vmatpush1.msra.mxu0 0.0
    %1614 = vmatprep.subr.mxu0 0.0
    %1615 = vmatpush1.msra.mxu0 0.0
    %1616 = vmatprep.subr.mxu0 0.0
    %1617 = vmatpush1.msra.mxu0 0.0
    %1618 = vmatprep.subr.mxu0 0.0
    %1619 = vmatpush1.msra.mxu0 0.0
    %1620 = vmatprep.subr.mxu0 0.0
    %1621 = vmatpush1.msra.mxu0 0.0
    %1622 = vmatprep.subr.mxu0 0.0
    %1623 = vmatpush1.msra.mxu0 0.0
    %1624 = vmatprep.subr.mxu0 0.0
    %1625 = vmatpush1.msra.mxu0 0.0
    %1626 = vmatprep.subr.mxu0 0.0
    %1627 = vmatpush1.msra.mxu0 0.0
    %1628 = vmatprep.subr.mxu0 0.0
    %1629 = vmatpush1.msra.mxu0 0.0
    %1630 = vmatprep.subr.mxu0 0.0
    %1631 = vmatpush1.msra.mxu0 0.0
    %1632 = vmatprep.subr.mxu0 0.0
    %1633 = vmatpush1.msra.mxu0 0.0
    %1634 = vmatprep.subr.mxu0 0.0
    %1635 = vmatpush1.msra.mxu0 0.0
    %1636 = vmatprep.subr.mxu0 0.0
    %1637 = vmatpush1.msra.mxu0 0.0
    %1638 = vmatprep.subr.mxu0 0.0
    %1639 = vmatpush1.msra.mxu0 0.0
    %1640 = vmatprep.subr.mxu0 0.0
    %1641 = vmatpush1.msra.mxu0 0.0
    %1642 = vmatprep.subr.mxu0 0.0
    %1643 = vmatpush1.msra.mxu0 0.0
    %1644 = vmatprep.mubr.f32.mxu0 0.0
    %1645 = vmatmul.mubr.f32.gmra.mrb[0].mxu0 %v1578
    %v1646 = vpop.f32.mrb[0].mxu0
    %v1647 = vadd.f32 0.0, %v1646
    %v1648 = vpop.f32.mrb[0].mxu0
    %1649 = vdwg.mxu0
    %v1650 = vadd.f32 %v1566, %v1647
    %v1651 = vld [vmem:[#allocation2 + $0xf] sm:$0x1]
    %v1652 = vld [vmem:[#allocation2 + $0x1f] sm:$0x1]
    %s1653 = scalar_lea.vmem %s4, 480
    %v1654 = vld [vmem:[%s1653] sm:$0xff]
    %v1655 = vld [vmem:[%s1653 + $0x8] sm:$0xff]
    %v1656 = vld [vmem:[%s1653 + $0x10] sm:$0xff]
    %v1657 = vld [vmem:[%s1653 + $0x18] sm:$0xff]
    %v1660 = vrot.slane %v1652, 7
    %v1661 = vsel %vm409, %v1660, %v1651
    %v1662 = vsel %vm220, %v1661, 0
    %1664 = vmatprep.subr.mxu0 0.0
    %1665 = vmatpush1.msra.mxu0 %v1654
    %1666 = vmatprep.subr.mxu0 0.0
    %1667 = vmatpush1.msra.mxu0 %v1655
    %1668 = vmatprep.subr.mxu0 0.0
    %1669 = vmatpush1.msra.mxu0 %v1656
    %1670 = vmatprep.subr.mxu0 0.0
    %1671 = vmatpush1.msra.mxu0 %v1657
    %1672 = vmatprep.subr.mxu0 0.0
    %1673 = vmatpush1.msra.mxu0 0.0
    %1674 = vmatprep.subr.mxu0 0.0
    %1675 = vmatpush1.msra.mxu0 0.0
    %1676 = vmatprep.subr.mxu0 0.0
    %1677 = vmatpush1.msra.mxu0 0.0
    %1678 = vmatprep.subr.mxu0 0.0
    %1679 = vmatpush1.msra.mxu0 0.0
    %1680 = vmatprep.subr.mxu0 0.0
    %1681 = vmatpush1.msra.mxu0 0.0
    %1682 = vmatprep.subr.mxu0 0.0
    %1683 = vmatpush1.msra.mxu0 0.0
    %1684 = vmatprep.subr.mxu0 0.0
    %1685 = vmatpush1.msra.mxu0 0.0
    %1686 = vmatprep.subr.mxu0 0.0
    %1687 = vmatpush1.msra.mxu0 0.0
    %1688 = vmatprep.subr.mxu0 0.0
    %1689 = vmatpush1.msra.mxu0 0.0
    %1690 = vmatprep.subr.mxu0 0.0
    %1691 = vmatpush1.msra.mxu0 0.0
    %1692 = vmatprep.subr.mxu0 0.0
    %1693 = vmatpush1.msra.mxu0 0.0
    %1694 = vmatprep.subr.mxu0 0.0
    %1695 = vmatpush1.msra.mxu0 0.0
    %1696 = vmatprep.subr.mxu0 0.0
    %1697 = vmatpush1.msra.mxu0 0.0
    %1698 = vmatprep.subr.mxu0 0.0
    %1699 = vmatpush1.msra.mxu0 0.0
    %1700 = vmatprep.subr.mxu0 0.0
    %1701 = vmatpush1.msra.mxu0 0.0
    %1702 = vmatprep.subr.mxu0 0.0
    %1703 = vmatpush1.msra.mxu0 0.0
    %1704 = vmatprep.subr.mxu0 0.0
    %1705 = vmatpush1.msra.mxu0 0.0
    %1706 = vmatprep.subr.mxu0 0.0
    %1707 = vmatpush1.msra.mxu0 0.0
    %1708 = vmatprep.subr.mxu0 0.0
    %1709 = vmatpush1.msra.mxu0 0.0
    %1710 = vmatprep.subr.mxu0 0.0
    %1711 = vmatpush1.msra.mxu0 0.0
    %1712 = vmatprep.subr.mxu0 0.0
    %1713 = vmatpush1.msra.mxu0 0.0
    %1714 = vmatprep.subr.mxu0 0.0
    %1715 = vmatpush1.msra.mxu0 0.0
    %1716 = vmatprep.subr.mxu0 0.0
    %1717 = vmatpush1.msra.mxu0 0.0
    %1718 = vmatprep.subr.mxu0 0.0
    %1719 = vmatpush1.msra.mxu0 0.0
    %1720 = vmatprep.subr.mxu0 0.0
    %1721 = vmatpush1.msra.mxu0 0.0
    %1722 = vmatprep.subr.mxu0 0.0
    %1723 = vmatpush1.msra.mxu0 0.0
    %1724 = vmatprep.subr.mxu0 0.0
    %1725 = vmatpush1.msra.mxu0 0.0
    %1726 = vmatprep.subr.mxu0 0.0
    %1727 = vmatpush1.msra.mxu0 0.0
    %1728 = vmatprep.mubr.f32.mxu0 0.0
    %1729 = vmatmul.mubr.f32.gmra.mrb[0].mxu0 %v1662
    %v1730 = vpop.f32.mrb[0].mxu0
    %v1731 = vadd.f32 0.0, %v1730
    %v1732 = vpop.f32.mrb[0].mxu0
    %1733 = vdwg.mxu0
    %v1734 = vadd.f32 %v1650, %v1731
    %v1735 = vld [vmem:[%s5] sm:$0x1]
    %v1737 = vlaneseq
    %v1738 = vshrl.u32 %v1737, 7
    %v1739 = vsub.s32 0, %v1738
    %v1740 = vrot.slane %v1735, %v1739
    %v1742 = vadd.f32 %v1734, %v1740
    %vm1743 = vcmask 25600
    %1744 = vst.msk [vmem:[#allocation3] sm:$0x3] %vm1743, %v1742
    // Predicated region
    $region26: #{dgcnn_forward.1} parent=1 // pred_check
      _
    $region27: #{dgcnn_forward.1} parent=1 // pred_check_branch
      %1746 = sbr.rel (0) target = $region29
    $region28: #{dgcnn_forward.1} parent=1 // pred_region
      %s1748 = ssub.s32 32, 32
      %1749 = vsyncadd [#allocation4], %s1748
      %s1751 = sshll.u32 [#allocation3], 4
      %s1752 = int_to_ptr.vmem [resolvable:$true] %s1751
      %1754 = dma.vmem_to_hbm [thread:$0]  %s1752, 32, %s6, [#allocation4]
    $region29: #{dgcnn_forward.1} parent=1 // pred_fallthru
      _
    // Predicated region
    $region30: #{dgcnn_forward.1} parent=1 // pred_check
      _
    $region31: #{dgcnn_forward.1} parent=1 // pred_check_branch
      %1756 = sbr.rel (0) target = $region33
    $region32: #{dgcnn_forward.1} parent=1 // pred_region
      %1757 = dma.done [#allocation4], 32
    $region33: #{dgcnn_forward.1} parent=1 // pred_fallthru
      _
    %1758 = vsyncpa [#allocation4], 1

</llo_original>
